<compile_context>
chip_gen: v5e
topology: v5e:2x2
jax: 0.10.0
libtpu: 0.0.40
codegen_flags: <defaults>
</compile_context>

<pallas_src>
import math

import jax
import jax.numpy as jnp
from jax import lax
from jax.experimental import pallas as pl
from jax.experimental.pallas import tpu as pltpu

HIDDEN = 128
FC2 = 64
_UNROLL_T_MAX = 16  # fully unroll the recurrence up to this trajectory length


def _lstm_mlp_kernel(x_ref, wih_ref, whh_ref, b_ref, w2_ref, b2_ref,
                     w3_ref, b3_ref, out_ref, xw_ref):
    """One batch tile: hoisted input projection + LSTM recurrence + MLP head.

    x_ref   : (T, TB, D)    time-major input tile (TB rows, multiple of 8)
    wih_ref : (D, 4H)       input weights, gate order (i, f, o, g)
    whh_ref : (H, 4H)       recurrent weights (transposed), gate order (i,f,o,g)
    b_ref   : (1, 4H)       b_ih + b_hh (reordered)
    w2_ref  : (H, 64),  b2_ref : (1, 64)
    w3_ref  : (64, MP), b3_ref : (1, MP)   MP = m_control padded to 128 lanes
    out_ref : (TB, MP)
    xw_ref  : (T, TB, 4H)   VMEM scratch for the hoisted input projection
    """
    T, TB, D = x_ref.shape
    H = whh_ref.shape[0]

    # --- Hoisted input projection: one well-pipelined MXU pass over all T
    #     timesteps of this batch tile (fused bias).  Stored to VMEM scratch so
    #     the (T, TB, 4H) slab is never live in vregs during the recurrence.
    x2d = x_ref[...].reshape(T * TB, D)                     # sublane-aligned merge
    xw = jnp.dot(x2d, wih_ref[...], preferred_element_type=jnp.float32) + b_ref[...]
    xw_ref[...] = xw.reshape(T, TB, 4 * H)

    def step(t, h, c):
        # W_hh is re-read from VMEM each step (not pinned across the loop).
        gates = xw_ref[t] + jnp.dot(h, whh_ref[...],
                                    preferred_element_type=jnp.float32)
        sig = jax.nn.sigmoid(gates[:, :3 * H])              # i | f | o  (one EUP call)
        g_g = jnp.tanh(gates[:, 3 * H:])                    # g
        c_new = sig[:, H:2 * H] * c + sig[:, :H] * g_g
        h_new = sig[:, 2 * H:3 * H] * jnp.tanh(c_new)
        return h_new, c_new

    h = jnp.zeros((TB, H), jnp.float32)
    c = jnp.zeros((TB, H), jnp.float32)
    if T <= _UNROLL_T_MAX:
        for t in range(T):                                  # static, fully unrolled
            h, c = step(t, h, c)
    else:
        h, c = lax.fori_loop(0, T, lambda t, hc: step(t, *hc), (h, c), unroll=2)

    # --- MLP head: relu -> fc2 -> relu -> fc3 -> tanh (lane-dense output slab).
    y = jnp.maximum(h, 0.0)
    y = jnp.maximum(
        jnp.dot(y, w2_ref[...], preferred_element_type=jnp.float32) + b2_ref[...], 0.0)
    out_ref[...] = jnp.tanh(
        jnp.dot(y, w3_ref[...], preferred_element_type=jnp.float32) + b3_ref[...])


def _ceil_to(x, m):
    return ((x + m - 1) // m) * m


def _vmem_bytes(shape, itemsize=4):
    """f32 VMEM footprint of an array, padded to (8, 128) tiles."""
    dims = list(shape)
    dims[-1] = _ceil_to(dims[-1], 128)
    if len(dims) >= 2:
        dims[-2] = _ceil_to(dims[-2], 8)
    n = 1
    for d in dims:
        n *= d
    return n * itemsize


def _reorder_gates(w):
    """Permute PyTorch gate blocks (i, f, g, o) -> (i, f, o, g) along axis 0."""
    i, f, g, o = jnp.split(w, 4, axis=0)
    return jnp.concatenate([i, f, o, g], axis=0)


def _const_spec(shape):
    """Whole-array block with a constant index_map (fetched once, kept resident)."""
    nd = len(shape)
    return pl.BlockSpec(shape, lambda i: (0,) * nd)


def init_params(key, n_state, m_control):
    """Deterministic parameter init mimicking PyTorch's U(-1/sqrt(H), 1/sqrt(H))."""
    D = n_state + m_control
    H = HIDDEN
    ks = jax.random.split(key, 10)
    s = 1.0 / math.sqrt(H)

    def u(k, shape, scale):
        return jax.random.uniform(k, shape, jnp.float32, minval=-scale, maxval=scale)

    return {
        # LSTM (PyTorch layout: (4H, in) / (4H, H), gate order i, f, g, o)
        "W_ih": u(ks[0], (4 * H, D), s),
        "W_hh": u(ks[1], (4 * H, H), s),
        "b_ih": u(ks[2], (4 * H,), s),
        "b_hh": u(ks[3], (4 * H,), s),
        # fc2: Linear(128, 64), fc3: Linear(64, m_control)
        "W2": u(ks[4], (FC2, H), 1.0 / math.sqrt(H)),
        "b2": u(ks[5], (FC2,), 1.0 / math.sqrt(H)),
        "W3": u(ks[6], (m_control, FC2), 1.0 / math.sqrt(FC2)),
        "b3": u(ks[7], (m_control,), 1.0 / math.sqrt(FC2)),
    }


@jax.jit
def gamma_linear_lstm_pallas(state, u, params):
    """
    state : (bs, T, n_state)
    u     : (bs, T, m_control)
    returns gamma : (bs, m_control)
    """
    # TODO(synk): the PyTorch module caches (h, c) across forward calls; this
    # kernel models a fresh call with zero initial hidden state only.
    bs, T, n_state = state.shape
    m_control = u.shape[-1]
    H = HIDDEN
    D = n_state + m_control

    # Batch tiling: tile rows are a multiple of 8 sublanes, capped at 64 rows
    # (vreg-pressure cap per review); batch padded to a whole number of tiles.
    BP8 = _ceil_to(bs, 8)
    TB = min(64, BP8)
    BP = _ceil_to(BP8, TB)
    MP = _ceil_to(m_control, 128)

    # Single fused input: concat([state, u]) once in the wrapper, time-major.
    # TODO(synk): at production T*bs, read (T, TB, D) slices straight from the
    # batch-major HBM layout via the index_map instead of this XLA transpose.
    x = jnp.concatenate([state, u], axis=-1).astype(jnp.float32)   # (bs, T, D)
    x = jnp.transpose(x, (1, 0, 2))                                # (T, bs, D)
    if BP != bs:
        x = jnp.pad(x, ((0, 0), (0, BP - bs), (0, 0)))

    # Weights: gate-reordered (i, f, o, g), transposed to (in, out); fc3 output
    # lane-padded to 128 so the final store is lane-dense.
    wih_t = _reorder_gates(params["W_ih"]).T                       # (D, 4H)
    whh_t = _reorder_gates(params["W_hh"]).T                       # (H, 4H)
    b = _reorder_gates(params["b_ih"] + params["b_hh"]).reshape(1, 4 * H)
    w2_t = params["W2"].T                                          # (H, 64)
    b2 = params["b2"].reshape(1, FC2)
    w3_t = jnp.zeros((FC2, MP), jnp.float32).at[:, :m_control].set(params["W3"].T)
    b3 = jnp.zeros((1, MP), jnp.float32).at[:, :m_control].set(params["b3"])

    weights = (wih_t, whh_t, b, w2_t, b2, w3_t, b3)

    # Explicit VMEM budget: padded per-tile footprint (double-buffered blocks +
    # resident weights + xw scratch) with slack, clamped to safe bounds so the
    # kernel stays inside v7x's smaller VMEM while matching defaults elsewhere.
    needed = (2 * _vmem_bytes((T, TB, D)) + 2 * _vmem_bytes((TB, MP))
              + _vmem_bytes((T, TB, 4 * H))
              + 2 * sum(_vmem_bytes(w.shape) for w in weights))
    vmem_limit = int(min(max(needed + (4 << 20), 32 << 20), 64 << 20))

    out = pl.pallas_call(
        _lstm_mlp_kernel,
        out_shape=jax.ShapeDtypeStruct((BP, MP), jnp.float32),
        grid=(BP // TB,),
        in_specs=[pl.BlockSpec((T, TB, D), lambda i: (0, i, 0))]
                 + [_const_spec(w.shape) for w in weights],
        out_specs=pl.BlockSpec((TB, MP), lambda i: (i, 0)),
        scratch_shapes=[pltpu.VMEM((T, TB, 4 * H), jnp.float32)],
        compiler_params=pltpu.CompilerParams(
            dimension_semantics=("parallel",),
            vmem_limit_bytes=vmem_limit),
    )(x, *weights)

    return out[:bs, :m_control]


def gamma_linear_lstm_ref(state, u, params):
    """Pure-JAX reference (mirrors the PyTorch forward) for verification."""
    H = HIDDEN
    x = jnp.concatenate([state, u], axis=-1).astype(jnp.float32)   # (bs, T, D)
    bs = x.shape[0]
    wih_t = params["W_ih"].T
    whh_t = params["W_hh"].T
    b = params["b_ih"] + params["b_hh"]

    def step(carry, x_t):
        h, c = carry
        gates = x_t @ wih_t + h @ whh_t + b
        i_g = jax.nn.sigmoid(gates[:, 0 * H:1 * H])
        f_g = jax.nn.sigmoid(gates[:, 1 * H:2 * H])
        g_g = jnp.tanh(gates[:, 2 * H:3 * H])
        o_g = jax.nn.sigmoid(gates[:, 3 * H:4 * H])
        c_new = f_g * c + i_g * g_g
        h_new = o_g * jnp.tanh(c_new)
        return (h_new, c_new), None

    h0 = jnp.zeros((bs, H), jnp.float32)
    c0 = jnp.zeros((bs, H), jnp.float32)
    (h_T, _), _ = lax.scan(step, (h0, c0), jnp.transpose(x, (1, 0, 2)))

    y = jnp.maximum(h_T, 0.0)
    y = jnp.maximum(y @ params["W2"].T + params["b2"], 0.0)
    y = jnp.tanh(y @ params["W3"].T + params["b3"])
    return y


if __name__ == "__main__":
    # Small shapes consistent with the module's forward:
    #   state (bs, traj_len, n_state), u (bs, traj_len, m_control)
    bs, traj_len, n_state, m_control = 2, 8, 4, 4

    key = jax.random.PRNGKey(0)
    k_params, k_state, k_u = jax.random.split(key, 3)

    params = init_params(k_params, n_state, m_control)
    state = jax.random.normal(k_state, (bs, traj_len, n_state), jnp.float32)
    u = jax.random.normal(k_u, (bs, traj_len, m_control), jnp.float32)

    out = jax.block_until_ready(gamma_linear_lstm_pallas(state, u, params))
    ref = gamma_linear_lstm_ref(state, u, params)
    assert out.shape == (bs, m_control)
    assert jnp.allclose(out, ref, atol=1e-5, rtol=1e-5), (out, ref)

    # Second check: multi-tile batch grid (>1 program) + fori_loop recurrence.
    bs2, T2 = 96, 20
    ka, kb = jax.random.split(jax.random.PRNGKey(1))
    state2 = jax.random.normal(ka, (bs2, T2, n_state), jnp.float32)
    u2 = jax.random.normal(kb, (bs2, T2, m_control), jnp.float32)
    out2 = jax.block_until_ready(gamma_linear_lstm_pallas(state2, u2, params))
    ref2 = gamma_linear_lstm_ref(state2, u2, params)
    assert out2.shape == (bs2, m_control)
    assert jnp.allclose(out2, ref2, atol=1e-4, rtol=1e-4)

    print("KERNEL_OK")
</pallas_src>

<mosaic_0001>
module attributes {stable_mosaic.version = 11 : i64} {
  func.func @_lstm_mlp_kernel(%arg0: i32, %arg1: memref<8x8x8xf32, #tpu.memory_space<vmem>>, %arg2: memref<8x512xf32, #tpu.memory_space<vmem>>, %arg3: memref<128x512xf32, #tpu.memory_space<vmem>>, %arg4: memref<1x512xf32, #tpu.memory_space<vmem>>, %arg5: memref<128x64xf32, #tpu.memory_space<vmem>>, %arg6: memref<1x64xf32, #tpu.memory_space<vmem>>, %arg7: memref<64x128xf32, #tpu.memory_space<vmem>>, %arg8: memref<1x128xf32, #tpu.memory_space<vmem>>, %arg9: memref<8x128xf32, #tpu.memory_space<vmem>>, %arg10: memref<8x8x512xf32, #tpu.memory_space<vmem>>) attributes {dimension_semantics = [#tpu.dimension_semantics<parallel>], iteration_bounds = array<i64: 1>, scalar_prefetch = 0 : i64, scratch_operands = 1 : i64, tpu.core_type = #tpu.core_type<tc>, window_params = [{transform_indices = @transform_0, window_bounds = array<i64: 8, 8, 8>}, {pipeline_mode = #tpu.pipeline_mode<synchronous>, transform_indices = @transform_1, window_bounds = array<i64: 8, 512>}, {pipeline_mode = #tpu.pipeline_mode<synchronous>, transform_indices = @transform_2, window_bounds = array<i64: 128, 512>}, {pipeline_mode = #tpu.pipeline_mode<synchronous>, transform_indices = @transform_3, window_bounds = array<i64: 1, 512>}, {pipeline_mode = #tpu.pipeline_mode<synchronous>, transform_indices = @transform_4, window_bounds = array<i64: 128, 64>}, {pipeline_mode = #tpu.pipeline_mode<synchronous>, transform_indices = @transform_5, window_bounds = array<i64: 1, 64>}, {pipeline_mode = #tpu.pipeline_mode<synchronous>, transform_indices = @transform_6, window_bounds = array<i64: 64, 128>}, {pipeline_mode = #tpu.pipeline_mode<synchronous>, transform_indices = @transform_7, window_bounds = array<i64: 1, 128>}, {transform_indices = @transform_8, window_bounds = array<i64: 8, 128>}]} {
    %c0 = arith.constant 0 : index
    %c0_0 = arith.constant 0 : index
    %c0_1 = arith.constant 0 : index
    %0 = vector.load %arg1[%c0, %c0_0, %c0_1] : memref<8x8x8xf32, #tpu.memory_space<vmem>>, vector<8x8x8xf32>
    %1 = vector.shape_cast %0 : vector<8x8x8xf32> to vector<64x8xf32>
    %c0_2 = arith.constant 0 : index
    %c0_3 = arith.constant 0 : index
    %2 = vector.load %arg2[%c0_2, %c0_3] : memref<8x512xf32, #tpu.memory_space<vmem>>, vector<8x512xf32>
    %cst = arith.constant dense<0.000000e+00> : vector<64x512xf32>
    %3 = tpu.matmul %1, %2, %cst {dimension_numbers = #tpu.dot_dimension_numbers<[1], [0], [0], [1], [0, 0, 1, 1], [], []>} : vector<64x8xf32>, vector<8x512xf32>, vector<64x512xf32> -> vector<64x512xf32>
    %c0_4 = arith.constant 0 : index
    %c0_5 = arith.constant 0 : index
    %4 = vector.load %arg4[%c0_4, %c0_5] : memref<1x512xf32, #tpu.memory_space<vmem>>, vector<1x512xf32>
    %5 = vector.broadcast %4 : vector<1x512xf32> to vector<64x512xf32>
    %6 = arith.addf %3, %5 : vector<64x512xf32>
    %7 = vector.shape_cast %6 : vector<64x512xf32> to vector<8x8x512xf32>
    %c0_6 = arith.constant 0 : index
    %c0_7 = arith.constant 0 : index
    %c0_8 = arith.constant 0 : index
    %8 = vector.load %arg10[%c0_6, %c0_7, %c0_8] : memref<8x8x512xf32, #tpu.memory_space<vmem>>, vector<8x8x512xf32>
    tpu.vector_store %arg10[%c0_6, %c0_7, %c0_8], %7 {strides = array<i32>} : memref<8x8x512xf32, #tpu.memory_space<vmem>>, vector<8x8x512xf32>,
    %cst_9 = arith.constant 0.000000e+00 : f32
    %9 = vector.broadcast %cst_9 : f32 to vector<8x128xf32>
    %cst_10 = arith.constant 0.000000e+00 : f32
    %10 = vector.broadcast %cst_10 : f32 to vector<8x128xf32>
    %c0_11 = arith.constant 0 : index
    %c0_12 = arith.constant 0 : index
    %c0_13 = arith.constant 0 : index
    %11 = vector.load %arg10[%c0_11, %c0_12, %c0_13] : memref<8x8x512xf32, #tpu.memory_space<vmem>>, vector<1x8x512xf32>
    %12 = vector.shape_cast %11 : vector<1x8x512xf32> to vector<8x512xf32>
    %c0_14 = arith.constant 0 : index
    %c0_15 = arith.constant 0 : index
    %13 = vector.load %arg3[%c0_14, %c0_15] : memref<128x512xf32, #tpu.memory_space<vmem>>, vector<128x512xf32>
    %cst_16 = arith.constant dense<0.000000e+00> : vector<8x512xf32>
    %14 = tpu.matmul %9, %13, %cst_16 {dimension_numbers = #tpu.dot_dimension_numbers<[1], [0], [0], [1], [0, 0, 1, 1], [], []>} : vector<8x128xf32>, vector<128x512xf32>, vector<8x512xf32> -> vector<8x512xf32>
    %15 = arith.addf %12, %14 : vector<8x512xf32>
    %16 = vector.extract_strided_slice %15 {offsets = [0, 0], sizes = [8, 384], strides = [1, 1]} : vector<8x512xf32> to vector<8x384xf32>
    %17 = arith.negf %16 : vector<8x384xf32>
    %18 = math.exp %17 : vector<8x384xf32>
    %cst_17 = arith.constant 1.000000e+00 : f32
    %19 = vector.broadcast %cst_17 : f32 to vector<8x384xf32>
    %20 = arith.addf %19, %18 : vector<8x384xf32>
    %21 = arith.divf %19, %20 : vector<8x384xf32>
    %22 = vector.extract_strided_slice %15 {offsets = [0, 384], sizes = [8, 128], strides = [1, 1]} : vector<8x512xf32> to vector<8x128xf32>
    %23 = math.tanh %22 : vector<8x128xf32>
    %24 = vector.extract_strided_slice %21 {offsets = [0, 128], sizes = [8, 128], strides = [1, 1]} : vector<8x384xf32> to vector<8x128xf32>
    %25 = arith.mulf %24, %10 : vector<8x128xf32>
    %26 = vector.extract_strided_slice %21 {offsets = [0, 0], sizes = [8, 128], strides = [1, 1]} : vector<8x384xf32> to vector<8x128xf32>
    %27 = arith.mulf %26, %23 : vector<8x128xf32>
    %28 = arith.addf %25, %27 : vector<8x128xf32>
    %29 = vector.extract_strided_slice %21 {offsets = [0, 256], sizes = [8, 128], strides = [1, 1]} : vector<8x384xf32> to vector<8x128xf32>
    %30 = math.tanh %28 : vector<8x128xf32>
    %31 = arith.mulf %29, %30 : vector<8x128xf32>
    %c1 = arith.constant 1 : index
    %c0_18 = arith.constant 0 : index
    %c0_19 = arith.constant 0 : index
    %32 = vector.load %arg10[%c1, %c0_18, %c0_19] : memref<8x8x512xf32, #tpu.memory_space<vmem>>, vector<1x8x512xf32>
    %33 = vector.shape_cast %32 : vector<1x8x512xf32> to vector<8x512xf32>
    %c0_20 = arith.constant 0 : index
    %c0_21 = arith.constant 0 : index
    %34 = vector.load %arg3[%c0_20, %c0_21] : memref<128x512xf32, #tpu.memory_space<vmem>>, vector<128x512xf32>
    %cst_22 = arith.constant dense<0.000000e+00> : vector<8x512xf32>
    %35 = tpu.matmul %31, %34, %cst_22 {dimension_numbers = #tpu.dot_dimension_numbers<[1], [0], [0], [1], [0, 0, 1, 1], [], []>} : vector<8x128xf32>, vector<128x512xf32>, vector<8x512xf32> -> vector<8x512xf32>
    %36 = arith.addf %33, %35 : vector<8x512xf32>
    %37 = vector.extract_strided_slice %36 {offsets = [0, 0], sizes = [8, 384], strides = [1, 1]} : vector<8x512xf32> to vector<8x384xf32>
    %38 = arith.negf %37 : vector<8x384xf32>
    %39 = math.exp %38 : vector<8x384xf32>
    %cst_23 = arith.constant 1.000000e+00 : f32
    %40 = vector.broadcast %cst_23 : f32 to vector<8x384xf32>
    %41 = arith.addf %40, %39 : vector<8x384xf32>
    %42 = arith.divf %40, %41 : vector<8x384xf32>
    %43 = vector.extract_strided_slice %36 {offsets = [0, 384], sizes = [8, 128], strides = [1, 1]} : vector<8x512xf32> to vector<8x128xf32>
    %44 = math.tanh %43 : vector<8x128xf32>
    %45 = vector.extract_strided_slice %42 {offsets = [0, 128], sizes = [8, 128], strides = [1, 1]} : vector<8x384xf32> to vector<8x128xf32>
    %46 = arith.mulf %45, %28 : vector<8x128xf32>
    %47 = vector.extract_strided_slice %42 {offsets = [0, 0], sizes = [8, 128], strides = [1, 1]} : vector<8x384xf32> to vector<8x128xf32>
    %48 = arith.mulf %47, %44 : vector<8x128xf32>
    %49 = arith.addf %46, %48 : vector<8x128xf32>
    %50 = vector.extract_strided_slice %42 {offsets = [0, 256], sizes = [8, 128], strides = [1, 1]} : vector<8x384xf32> to vector<8x128xf32>
    %51 = math.tanh %49 : vector<8x128xf32>
    %52 = arith.mulf %50, %51 : vector<8x128xf32>
    %c2 = arith.constant 2 : index
    %c0_24 = arith.constant 0 : index
    %c0_25 = arith.constant 0 : index
    %53 = vector.load %arg10[%c2, %c0_24, %c0_25] : memref<8x8x512xf32, #tpu.memory_space<vmem>>, vector<1x8x512xf32>
    %54 = vector.shape_cast %53 : vector<1x8x512xf32> to vector<8x512xf32>
    %c0_26 = arith.constant 0 : index
    %c0_27 = arith.constant 0 : index
    %55 = vector.load %arg3[%c0_26, %c0_27] : memref<128x512xf32, #tpu.memory_space<vmem>>, vector<128x512xf32>
    %cst_28 = arith.constant dense<0.000000e+00> : vector<8x512xf32>
    %56 = tpu.matmul %52, %55, %cst_28 {dimension_numbers = #tpu.dot_dimension_numbers<[1], [0], [0], [1], [0, 0, 1, 1], [], []>} : vector<8x128xf32>, vector<128x512xf32>, vector<8x512xf32> -> vector<8x512xf32>
    %57 = arith.addf %54, %56 : vector<8x512xf32>
    %58 = vector.extract_strided_slice %57 {offsets = [0, 0], sizes = [8, 384], strides = [1, 1]} : vector<8x512xf32> to vector<8x384xf32>
    %59 = arith.negf %58 : vector<8x384xf32>
    %60 = math.exp %59 : vector<8x384xf32>
    %cst_29 = arith.constant 1.000000e+00 : f32
    %61 = vector.broadcast %cst_29 : f32 to vector<8x384xf32>
    %62 = arith.addf %61, %60 : vector<8x384xf32>
    %63 = arith.divf %61, %62 : vector<8x384xf32>
    %64 = vector.extract_strided_slice %57 {offsets = [0, 384], sizes = [8, 128], strides = [1, 1]} : vector<8x512xf32> to vector<8x128xf32>
    %65 = math.tanh %64 : vector<8x128xf32>
    %66 = vector.extract_strided_slice %63 {offsets = [0, 128], sizes = [8, 128], strides = [1, 1]} : vector<8x384xf32> to vector<8x128xf32>
    %67 = arith.mulf %66, %49 : vector<8x128xf32>
    %68 = vector.extract_strided_slice %63 {offsets = [0, 0], sizes = [8, 128], strides = [1, 1]} : vector<8x384xf32> to vector<8x128xf32>
    %69 = arith.mulf %68, %65 : vector<8x128xf32>
    %70 = arith.addf %67, %69 : vector<8x128xf32>
    %71 = vector.extract_strided_slice %63 {offsets = [0, 256], sizes = [8, 128], strides = [1, 1]} : vector<8x384xf32> to vector<8x128xf32>
    %72 = math.tanh %70 : vector<8x128xf32>
    %73 = arith.mulf %71, %72 : vector<8x128xf32>
    %c3 = arith.constant 3 : index
    %c0_30 = arith.constant 0 : index
    %c0_31 = arith.constant 0 : index
    %74 = vector.load %arg10[%c3, %c0_30, %c0_31] : memref<8x8x512xf32, #tpu.memory_space<vmem>>, vector<1x8x512xf32>
    %75 = vector.shape_cast %74 : vector<1x8x512xf32> to vector<8x512xf32>
    %c0_32 = arith.constant 0 : index
    %c0_33 = arith.constant 0 : index
    %76 = vector.load %arg3[%c0_32, %c0_33] : memref<128x512xf32, #tpu.memory_space<vmem>>, vector<128x512xf32>
    %cst_34 = arith.constant dense<0.000000e+00> : vector<8x512xf32>
    %77 = tpu.matmul %73, %76, %cst_34 {dimension_numbers = #tpu.dot_dimension_numbers<[1], [0], [0], [1], [0, 0, 1, 1], [], []>} : vector<8x128xf32>, vector<128x512xf32>, vector<8x512xf32> -> vector<8x512xf32>
    %78 = arith.addf %75, %77 : vector<8x512xf32>
    %79 = vector.extract_strided_slice %78 {offsets = [0, 0], sizes = [8, 384], strides = [1, 1]} : vector<8x512xf32> to vector<8x384xf32>
    %80 = arith.negf %79 : vector<8x384xf32>
    %81 = math.exp %80 : vector<8x384xf32>
    %cst_35 = arith.constant 1.000000e+00 : f32
    %82 = vector.broadcast %cst_35 : f32 to vector<8x384xf32>
    %83 = arith.addf %82, %81 : vector<8x384xf32>
    %84 = arith.divf %82, %83 : vector<8x384xf32>
    %85 = vector.extract_strided_slice %78 {offsets = [0, 384], sizes = [8, 128], strides = [1, 1]} : vector<8x512xf32> to vector<8x128xf32>
    %86 = math.tanh %85 : vector<8x128xf32>
    %87 = vector.extract_strided_slice %84 {offsets = [0, 128], sizes = [8, 128], strides = [1, 1]} : vector<8x384xf32> to vector<8x128xf32>
    %88 = arith.mulf %87, %70 : vector<8x128xf32>
    %89 = vector.extract_strided_slice %84 {offsets = [0, 0], sizes = [8, 128], strides = [1, 1]} : vector<8x384xf32> to vector<8x128xf32>
    %90 = arith.mulf %89, %86 : vector<8x128xf32>
    %91 = arith.addf %88, %90 : vector<8x128xf32>
    %92 = vector.extract_strided_slice %84 {offsets = [0, 256], sizes = [8, 128], strides = [1, 1]} : vector<8x384xf32> to vector<8x128xf32>
    %93 = math.tanh %91 : vector<8x128xf32>
    %94 = arith.mulf %92, %93 : vector<8x128xf32>
    %c4 = arith.constant 4 : index
    %c0_36 = arith.constant 0 : index
    %c0_37 = arith.constant 0 : index
    %95 = vector.load %arg10[%c4, %c0_36, %c0_37] : memref<8x8x512xf32, #tpu.memory_space<vmem>>, vector<1x8x512xf32>
    %96 = vector.shape_cast %95 : vector<1x8x512xf32> to vector<8x512xf32>
    %c0_38 = arith.constant 0 : index
    %c0_39 = arith.constant 0 : index
    %97 = vector.load %arg3[%c0_38, %c0_39] : memref<128x512xf32, #tpu.memory_space<vmem>>, vector<128x512xf32>
    %cst_40 = arith.constant dense<0.000000e+00> : vector<8x512xf32>
    %98 = tpu.matmul %94, %97, %cst_40 {dimension_numbers = #tpu.dot_dimension_numbers<[1], [0], [0], [1], [0, 0, 1, 1], [], []>} : vector<8x128xf32>, vector<128x512xf32>, vector<8x512xf32> -> vector<8x512xf32>
    %99 = arith.addf %96, %98 : vector<8x512xf32>
    %100 = vector.extract_strided_slice %99 {offsets = [0, 0], sizes = [8, 384], strides = [1, 1]} : vector<8x512xf32> to vector<8x384xf32>
    %101 = arith.negf %100 : vector<8x384xf32>
    %102 = math.exp %101 : vector<8x384xf32>
    %cst_41 = arith.constant 1.000000e+00 : f32
    %103 = vector.broadcast %cst_41 : f32 to vector<8x384xf32>
    %104 = arith.addf %103, %102 : vector<8x384xf32>
    %105 = arith.divf %103, %104 : vector<8x384xf32>
    %106 = vector.extract_strided_slice %99 {offsets = [0, 384], sizes = [8, 128], strides = [1, 1]} : vector<8x512xf32> to vector<8x128xf32>
    %107 = math.tanh %106 : vector<8x128xf32>
    %108 = vector.extract_strided_slice %105 {offsets = [0, 128], sizes = [8, 128], strides = [1, 1]} : vector<8x384xf32> to vector<8x128xf32>
    %109 = arith.mulf %108, %91 : vector<8x128xf32>
    %110 = vector.extract_strided_slice %105 {offsets = [0, 0], sizes = [8, 128], strides = [1, 1]} : vector<8x384xf32> to vector<8x128xf32>
    %111 = arith.mulf %110, %107 : vector<8x128xf32>
    %112 = arith.addf %109, %111 : vector<8x128xf32>
    %113 = vector.extract_strided_slice %105 {offsets = [0, 256], sizes = [8, 128], strides = [1, 1]} : vector<8x384xf32> to vector<8x128xf32>
    %114 = math.tanh %112 : vector<8x128xf32>
    %115 = arith.mulf %113, %114 : vector<8x128xf32>
    %c5 = arith.constant 5 : index
    %c0_42 = arith.constant 0 : index
    %c0_43 = arith.constant 0 : index
    %116 = vector.load %arg10[%c5, %c0_42, %c0_43] : memref<8x8x512xf32, #tpu.memory_space<vmem>>, vector<1x8x512xf32>
    %117 = vector.shape_cast %116 : vector<1x8x512xf32> to vector<8x512xf32>
    %c0_44 = arith.constant 0 : index
    %c0_45 = arith.constant 0 : index
    %118 = vector.load %arg3[%c0_44, %c0_45] : memref<128x512xf32, #tpu.memory_space<vmem>>, vector<128x512xf32>
    %cst_46 = arith.constant dense<0.000000e+00> : vector<8x512xf32>
    %119 = tpu.matmul %115, %118, %cst_46 {dimension_numbers = #tpu.dot_dimension_numbers<[1], [0], [0], [1], [0, 0, 1, 1], [], []>} : vector<8x128xf32>, vector<128x512xf32>, vector<8x512xf32> -> vector<8x512xf32>
    %120 = arith.addf %117, %119 : vector<8x512xf32>
    %121 = vector.extract_strided_slice %120 {offsets = [0, 0], sizes = [8, 384], strides = [1, 1]} : vector<8x512xf32> to vector<8x384xf32>
    %122 = arith.negf %121 : vector<8x384xf32>
    %123 = math.exp %122 : vector<8x384xf32>
    %cst_47 = arith.constant 1.000000e+00 : f32
    %124 = vector.broadcast %cst_47 : f32 to vector<8x384xf32>
    %125 = arith.addf %124, %123 : vector<8x384xf32>
    %126 = arith.divf %124, %125 : vector<8x384xf32>
    %127 = vector.extract_strided_slice %120 {offsets = [0, 384], sizes = [8, 128], strides = [1, 1]} : vector<8x512xf32> to vector<8x128xf32>
    %128 = math.tanh %127 : vector<8x128xf32>
    %129 = vector.extract_strided_slice %126 {offsets = [0, 128], sizes = [8, 128], strides = [1, 1]} : vector<8x384xf32> to vector<8x128xf32>
    %130 = arith.mulf %129, %112 : vector<8x128xf32>
    %131 = vector.extract_strided_slice %126 {offsets = [0, 0], sizes = [8, 128], strides = [1, 1]} : vector<8x384xf32> to vector<8x128xf32>
    %132 = arith.mulf %131, %128 : vector<8x128xf32>
    %133 = arith.addf %130, %132 : vector<8x128xf32>
    %134 = vector.extract_strided_slice %126 {offsets = [0, 256], sizes = [8, 128], strides = [1, 1]} : vector<8x384xf32> to vector<8x128xf32>
    %135 = math.tanh %133 : vector<8x128xf32>
    %136 = arith.mulf %134, %135 : vector<8x128xf32>
    %c6 = arith.constant 6 : index
    %c0_48 = arith.constant 0 : index
    %c0_49 = arith.constant 0 : index
    %137 = vector.load %arg10[%c6, %c0_48, %c0_49] : memref<8x8x512xf32, #tpu.memory_space<vmem>>, vector<1x8x512xf32>
    %138 = vector.shape_cast %137 : vector<1x8x512xf32> to vector<8x512xf32>
    %c0_50 = arith.constant 0 : index
    %c0_51 = arith.constant 0 : index
    %139 = vector.load %arg3[%c0_50, %c0_51] : memref<128x512xf32, #tpu.memory_space<vmem>>, vector<128x512xf32>
    %cst_52 = arith.constant dense<0.000000e+00> : vector<8x512xf32>
    %140 = tpu.matmul %136, %139, %cst_52 {dimension_numbers = #tpu.dot_dimension_numbers<[1], [0], [0], [1], [0, 0, 1, 1], [], []>} : vector<8x128xf32>, vector<128x512xf32>, vector<8x512xf32> -> vector<8x512xf32>
    %141 = arith.addf %138, %140 : vector<8x512xf32>
    %142 = vector.extract_strided_slice %141 {offsets = [0, 0], sizes = [8, 384], strides = [1, 1]} : vector<8x512xf32> to vector<8x384xf32>
    %143 = arith.negf %142 : vector<8x384xf32>
    %144 = math.exp %143 : vector<8x384xf32>
    %cst_53 = arith.constant 1.000000e+00 : f32
    %145 = vector.broadcast %cst_53 : f32 to vector<8x384xf32>
    %146 = arith.addf %145, %144 : vector<8x384xf32>
    %147 = arith.divf %145, %146 : vector<8x384xf32>
    %148 = vector.extract_strided_slice %141 {offsets = [0, 384], sizes = [8, 128], strides = [1, 1]} : vector<8x512xf32> to vector<8x128xf32>
    %149 = math.tanh %148 : vector<8x128xf32>
    %150 = vector.extract_strided_slice %147 {offsets = [0, 128], sizes = [8, 128], strides = [1, 1]} : vector<8x384xf32> to vector<8x128xf32>
    %151 = arith.mulf %150, %133 : vector<8x128xf32>
    %152 = vector.extract_strided_slice %147 {offsets = [0, 0], sizes = [8, 128], strides = [1, 1]} : vector<8x384xf32> to vector<8x128xf32>
    %153 = arith.mulf %152, %149 : vector<8x128xf32>
    %154 = arith.addf %151, %153 : vector<8x128xf32>
    %155 = vector.extract_strided_slice %147 {offsets = [0, 256], sizes = [8, 128], strides = [1, 1]} : vector<8x384xf32> to vector<8x128xf32>
    %156 = math.tanh %154 : vector<8x128xf32>
    %157 = arith.mulf %155, %156 : vector<8x128xf32>
    %c7 = arith.constant 7 : index
    %c0_54 = arith.constant 0 : index
    %c0_55 = arith.constant 0 : index
    %158 = vector.load %arg10[%c7, %c0_54, %c0_55] : memref<8x8x512xf32, #tpu.memory_space<vmem>>, vector<1x8x512xf32>
    %159 = vector.shape_cast %158 : vector<1x8x512xf32> to vector<8x512xf32>
    %c0_56 = arith.constant 0 : index
    %c0_57 = arith.constant 0 : index
    %160 = vector.load %arg3[%c0_56, %c0_57] : memref<128x512xf32, #tpu.memory_space<vmem>>, vector<128x512xf32>
    %cst_58 = arith.constant dense<0.000000e+00> : vector<8x512xf32>
    %161 = tpu.matmul %157, %160, %cst_58 {dimension_numbers = #tpu.dot_dimension_numbers<[1], [0], [0], [1], [0, 0, 1, 1], [], []>} : vector<8x128xf32>, vector<128x512xf32>, vector<8x512xf32> -> vector<8x512xf32>
    %162 = arith.addf %159, %161 : vector<8x512xf32>
    %163 = vector.extract_strided_slice %162 {offsets = [0, 0], sizes = [8, 384], strides = [1, 1]} : vector<8x512xf32> to vector<8x384xf32>
    %164 = arith.negf %163 : vector<8x384xf32>
    %165 = math.exp %164 : vector<8x384xf32>
    %cst_59 = arith.constant 1.000000e+00 : f32
    %166 = vector.broadcast %cst_59 : f32 to vector<8x384xf32>
    %167 = arith.addf %166, %165 : vector<8x384xf32>
    %168 = arith.divf %166, %167 : vector<8x384xf32>
    %169 = vector.extract_strided_slice %162 {offsets = [0, 384], sizes = [8, 128], strides = [1, 1]} : vector<8x512xf32> to vector<8x128xf32>
    %170 = math.tanh %169 : vector<8x128xf32>
    %171 = vector.extract_strided_slice %168 {offsets = [0, 128], sizes = [8, 128], strides = [1, 1]} : vector<8x384xf32> to vector<8x128xf32>
    %172 = arith.mulf %171, %154 : vector<8x128xf32>
    %173 = vector.extract_strided_slice %168 {offsets = [0, 0], sizes = [8, 128], strides = [1, 1]} : vector<8x384xf32> to vector<8x128xf32>
    %174 = arith.mulf %173, %170 : vector<8x128xf32>
    %175 = arith.addf %172, %174 : vector<8x128xf32>
    %176 = vector.extract_strided_slice %168 {offsets = [0, 256], sizes = [8, 128], strides = [1, 1]} : vector<8x384xf32> to vector<8x128xf32>
    %177 = math.tanh %175 : vector<8x128xf32>
    %178 = arith.mulf %176, %177 : vector<8x128xf32>
    %cst_60 = arith.constant 0.000000e+00 : f32
    %179 = vector.broadcast %cst_60 : f32 to vector<8x128xf32>
    %180 = arith.maximumf %178, %179 : vector<8x128xf32>
    %c0_61 = arith.constant 0 : index
    %c0_62 = arith.constant 0 : index
    %181 = vector.load %arg5[%c0_61, %c0_62] : memref<128x64xf32, #tpu.memory_space<vmem>>, vector<128x64xf32>
    %cst_63 = arith.constant dense<0.000000e+00> : vector<8x64xf32>
    %182 = tpu.matmul %180, %181, %cst_63 {dimension_numbers = #tpu.dot_dimension_numbers<[1], [0], [0], [1], [0, 0, 1, 1], [], []>} : vector<8x128xf32>, vector<128x64xf32>, vector<8x64xf32> -> vector<8x64xf32>
    %c0_64 = arith.constant 0 : index
    %c0_65 = arith.constant 0 : index
    %183 = vector.load %arg6[%c0_64, %c0_65] : memref<1x64xf32, #tpu.memory_space<vmem>>, vector<1x64xf32>
    %184 = vector.broadcast %183 : vector<1x64xf32> to vector<8x64xf32>
    %185 = arith.addf %182, %184 : vector<8x64xf32>
    %cst_66 = arith.constant 0.000000e+00 : f32
    %186 = vector.broadcast %cst_66 : f32 to vector<8x64xf32>
    %187 = arith.maximumf %185, %186 : vector<8x64xf32>
    %c0_67 = arith.constant 0 : index
    %c0_68 = arith.constant 0 : index
    %188 = vector.load %arg7[%c0_67, %c0_68] : memref<64x128xf32, #tpu.memory_space<vmem>>, vector<64x128xf32>
    %cst_69 = arith.constant dense<0.000000e+00> : vector<8x128xf32>
    %189 = tpu.matmul %187, %188, %cst_69 {dimension_numbers = #tpu.dot_dimension_numbers<[1], [0], [0], [1], [0, 0, 1, 1], [], []>} : vector<8x64xf32>, vector<64x128xf32>, vector<8x128xf32> -> vector<8x128xf32>
    %c0_70 = arith.constant 0 : index
    %c0_71 = arith.constant 0 : index
    %190 = vector.load %arg8[%c0_70, %c0_71] : memref<1x128xf32, #tpu.memory_space<vmem>>, vector<1x128xf32>
    %191 = vector.broadcast %190 : vector<1x128xf32> to vector<8x128xf32>
    %192 = arith.addf %189, %191 : vector<8x128xf32>
    %193 = math.tanh %192 : vector<8x128xf32>
    %c0_72 = arith.constant 0 : index
    %c0_73 = arith.constant 0 : index
    %194 = vector.load %arg9[%c0_72, %c0_73] : memref<8x128xf32, #tpu.memory_space<vmem>>, vector<8x128xf32>
    tpu.vector_store %arg9[%c0_72, %c0_73], %193 {strides = array<i32>} : memref<8x128xf32, #tpu.memory_space<vmem>>, vector<8x128xf32>,
    return
  }
  func.func @transform_0(%arg0: i32) -> (i32, i32, i32) {
    %c0_i32 = arith.constant 0 : i32
    %c0_i32_0 = arith.constant 0 : i32
    %c0_i32_1 = arith.constant 0 : i32
    return %c0_i32, %arg0, %c0_i32_0 : i32, i32, i32
  }
  func.func @transform_1(%arg0: i32) -> (i32, i32) {
    %c0_i32 = arith.constant 0 : i32
    %c0_i32_0 = arith.constant 0 : i32
    %c0_i32_1 = arith.constant 0 : i32
    return %c0_i32, %c0_i32_0 : i32, i32
  }
  func.func @transform_2(%arg0: i32) -> (i32, i32) {
    %c0_i32 = arith.constant 0 : i32
    %c0_i32_0 = arith.constant 0 : i32
    %c0_i32_1 = arith.constant 0 : i32
    return %c0_i32, %c0_i32_0 : i32, i32
  }
  func.func @transform_3(%arg0: i32) -> (i32, i32) {
    %c0_i32 = arith.constant 0 : i32
    %c0_i32_0 = arith.constant 0 : i32
    %c0_i32_1 = arith.constant 0 : i32
    return %c0_i32, %c0_i32_0 : i32, i32
  }
  func.func @transform_4(%arg0: i32) -> (i32, i32) {
    %c0_i32 = arith.constant 0 : i32
    %c0_i32_0 = arith.constant 0 : i32
    %c0_i32_1 = arith.constant 0 : i32
    return %c0_i32, %c0_i32_0 : i32, i32
  }
  func.func @transform_5(%arg0: i32) -> (i32, i32) {
    %c0_i32 = arith.constant 0 : i32
    %c0_i32_0 = arith.constant 0 : i32
    %c0_i32_1 = arith.constant 0 : i32
    return %c0_i32, %c0_i32_0 : i32, i32
  }
  func.func @transform_6(%arg0: i32) -> (i32, i32) {
    %c0_i32 = arith.constant 0 : i32
    %c0_i32_0 = arith.constant 0 : i32
    %c0_i32_1 = arith.constant 0 : i32
    return %c0_i32, %c0_i32_0 : i32, i32
  }
  func.func @transform_7(%arg0: i32) -> (i32, i32) {
    %c0_i32 = arith.constant 0 : i32
    %c0_i32_0 = arith.constant 0 : i32
    %c0_i32_1 = arith.constant 0 : i32
    return %c0_i32, %c0_i32_0 : i32, i32
  }
  func.func @transform_8(%arg0: i32) -> (i32, i32) {
    %c0_i32 = arith.constant 0 : i32
    %c0_i32_0 = arith.constant 0 : i32
    return %arg0, %c0_i32 : i32, i32
  }
}

</mosaic_0001>

<llo_original>
// kernel: gamma_linear_lstm_pallas.1
$region0: #{gamma_linear_lstm_pallas.1}
  #allocation0 [shape = 'u32[]', space=smem, size = 0x4, offset = 0x4, fixed_abs, tag = 'smem constant byte address 0x4 - core index']
  #allocation1 [shape = 'u32[72,128]{1,0:T(1,128)}', space=vmem, size = 0x9000, scoped, tag = 'internal scratch']
  #allocation2 [shape = 'f32[8,8,512]{2,1,0:T(8,128)}', space=vmem, size = 0x20000, scoped, tag = 'scratch operand']
  %s0 = inlined_call_operand.vmem [shape: f32[8,8,8], index: 0, kind: input, shape index: {}]
  %s1 = inlined_call_operand.vmem [shape: f32[8,512], index: 1, kind: input, shape index: {}]
  %s2 = inlined_call_operand.vmem [shape: f32[128,512], index: 2, kind: input, shape index: {}]
  %s3 = inlined_call_operand.vmem [shape: f32[1,512], index: 3, kind: input, shape index: {}]
  %s4 = inlined_call_operand.vmem [shape: f32[128,64], index: 4, kind: input, shape index: {}]
  %s5 = inlined_call_operand.vmem [shape: f32[1,64], index: 5, kind: input, shape index: {}]
  %s6 = inlined_call_operand.vmem [shape: f32[64,128], index: 6, kind: input, shape index: {}]
  %s7 = inlined_call_operand.vmem [shape: f32[1,128], index: 7, kind: input, shape index: {}]
  %s8 = inlined_call_operand.vmem [shape: f32[8,128], index: 8, kind: output, shape index: {}]
  %s9 = sld [smem:[#allocation0]]
  $region42: #{gamma_linear_lstm_pallas.1} parent=0
    _
  %s11 = ssub.s32 1, %s9
  %s12 = scalar_select 0, %s11, %s9
  // Predicated region
  $region2: #{gamma_linear_lstm_pallas.1} parent=0 // pred_check
    _
  $region3: #{gamma_linear_lstm_pallas.1} parent=0 // pred_check_branch
    %14 = sbr.rel (0) target = $region5
  $region4: #{gamma_linear_lstm_pallas.1} parent=0 // pred_region
    _
  $region5: #{gamma_linear_lstm_pallas.1} parent=0 // pred_fallthru
    _
  // Predicated region
  $region6: #{gamma_linear_lstm_pallas.1} parent=0 // pred_check
    _
  $region7: #{gamma_linear_lstm_pallas.1} parent=0 // pred_check_branch
    %16 = sbr.rel (0) target = $region9
  $region8: #{gamma_linear_lstm_pallas.1} parent=0 // pred_region
    _
  $region9: #{gamma_linear_lstm_pallas.1} parent=0 // pred_fallthru
    _
  // Predicated region
  $region10: #{gamma_linear_lstm_pallas.1} parent=0 // pred_check
    _
  $region11: #{gamma_linear_lstm_pallas.1} parent=0 // pred_check_branch
    %18 = sbr.rel (0) target = $region13
  $region12: #{gamma_linear_lstm_pallas.1} parent=0 // pred_region
    _
  $region13: #{gamma_linear_lstm_pallas.1} parent=0 // pred_fallthru
    _
  // Predicated region
  $region14: #{gamma_linear_lstm_pallas.1} parent=0 // pred_check
    _
  $region15: #{gamma_linear_lstm_pallas.1} parent=0 // pred_check_branch
    %20 = sbr.rel (0) target = $region17
  $region16: #{gamma_linear_lstm_pallas.1} parent=0 // pred_region
    _
  $region17: #{gamma_linear_lstm_pallas.1} parent=0 // pred_fallthru
    _
  // Predicated region
  $region18: #{gamma_linear_lstm_pallas.1} parent=0 // pred_check
    _
  $region19: #{gamma_linear_lstm_pallas.1} parent=0 // pred_check_branch
    %22 = sbr.rel (0) target = $region21
  $region20: #{gamma_linear_lstm_pallas.1} parent=0 // pred_region
    _
  $region21: #{gamma_linear_lstm_pallas.1} parent=0 // pred_fallthru
    _
  // Predicated region
  $region22: #{gamma_linear_lstm_pallas.1} parent=0 // pred_check
    _
  $region23: #{gamma_linear_lstm_pallas.1} parent=0 // pred_check_branch
    %24 = sbr.rel (0) target = $region25
  $region24: #{gamma_linear_lstm_pallas.1} parent=0 // pred_region
    _
  $region25: #{gamma_linear_lstm_pallas.1} parent=0 // pred_fallthru
    _
  // Predicated region
  $region26: #{gamma_linear_lstm_pallas.1} parent=0 // pred_check
    _
  $region27: #{gamma_linear_lstm_pallas.1} parent=0 // pred_check_branch
    %26 = sbr.rel (0) target = $region29
  $region28: #{gamma_linear_lstm_pallas.1} parent=0 // pred_region
    _
  $region29: #{gamma_linear_lstm_pallas.1} parent=0 // pred_fallthru
    _
  // Predicated region
  $region30: #{gamma_linear_lstm_pallas.1} parent=0 // pred_check
    _
  $region31: #{gamma_linear_lstm_pallas.1} parent=0 // pred_check_branch
    %28 = sbr.rel (0) target = $region33
  $region32: #{gamma_linear_lstm_pallas.1} parent=0 // pred_region
    _
  $region33: #{gamma_linear_lstm_pallas.1} parent=0 // pred_fallthru
    _
  %v29 = vld [vmem:[%s0] sm:$0xff]
  %v30 = vld [vmem:[%s0 + $0x8] sm:$0xff]
  %v31 = vld [vmem:[%s0 + $0x10] sm:$0xff]
  %v32 = vld [vmem:[%s0 + $0x18] sm:$0xff]
  %v33 = vld [vmem:[%s0 + $0x20] sm:$0xff]
  %v34 = vld [vmem:[%s0 + $0x28] sm:$0xff]
  %v35 = vld [vmem:[%s0 + $0x30] sm:$0xff]
  %v36 = vld [vmem:[%s0 + $0x38] sm:$0xff]
  %v37 = vld [vmem:[%s1] sm:$0xff]
  %v38 = vld [vmem:[%s1 + $0x8] sm:$0xff]
  %v39 = vld [vmem:[%s1 + $0x10] sm:$0xff]
  %v40 = vld [vmem:[%s1 + $0x18] sm:$0xff]
  %v41 = vld [vmem:[%s3] sm:$0xf]
  %v43 = vperm.slane %v41, 0
  %v44 = vperm.slane %v41, 1
  %v45 = vperm.slane %v41, 2
  %v46 = vperm.slane %v41, 3
  %vm51 = vcmask 64512
  %v53 = vsel %vm51, %v29, 0
  %v56 = vsel %vm51, %v30, 0
  %v59 = vsel %vm51, %v31, 0
  %v62 = vsel %vm51, %v32, 0
  %v65 = vsel %vm51, %v33, 0
  %v68 = vsel %vm51, %v34, 0
  %v71 = vsel %vm51, %v35, 0
  %v74 = vsel %vm51, %v36, 0
  %76 = vmatpush.msra.mxu0 0.0
  %77 = vmatpush.msra.mxu0 0.0
  %78 = vmatpush.msra.mxu0 0.0
  %79 = vmatpush.msra.mxu0 0.0
  %80 = vmatpush.msra.mxu0 0.0
  %81 = vmatpush.msra.mxu0 0.0
  %82 = vmatpush.msra.mxu0 0.0
  %83 = vmatpush.msra.mxu0 0.0
  %84 = vmatpush.msra.mxu0 0.0
  %85 = vmatpush.msra.mxu0 0.0
  %86 = vmatpush.msra.mxu0 0.0
  %87 = vmatpush.msra.mxu0 0.0
  %88 = vmatpush.msra.mxu0 0.0
  %89 = vmatpush.msra.mxu0 0.0
  %90 = vmatpush.msra.mxu0 0.0
  %91 = vmatpush.msra.mxu0 %v37
  %92 = vmatmul.f32.gmra.mxu0 %v53
  %v93 = vpop.f32.mrf.mxu0
  %v94 = vadd.f32 %v43, %v93
  %95 = vmatmul.f32.gmra.mxu0 %v56
  %v96 = vpop.f32.mrf.mxu0
  %v97 = vadd.f32 %v43, %v96
  %98 = vmatmul.f32.gmra.mxu0 %v59
  %v99 = vpop.f32.mrf.mxu0
  %v100 = vadd.f32 %v43, %v99
  %101 = vmatmul.f32.gmra.mxu0 %v62
  %v102 = vpop.f32.mrf.mxu0
  %v103 = vadd.f32 %v43, %v102
  %104 = vmatmul.f32.gmra.mxu0 %v65
  %v105 = vpop.f32.mrf.mxu0
  %v106 = vadd.f32 %v43, %v105
  %107 = vmatmul.f32.gmra.mxu0 %v68
  %v108 = vpop.f32.mrf.mxu0
  %v109 = vadd.f32 %v43, %v108
  %110 = vmatmul.f32.gmra.mxu0 %v71
  %v111 = vpop.f32.mrf.mxu0
  %v112 = vadd.f32 %v43, %v111
  %113 = vmatmul.f32.gmra.mxu0 %v74
  %v114 = vpop.f32.mrf.mxu0
  %v115 = vadd.f32 %v43, %v114
  %116 = vdwg.mxu0
  %117 = vmatpush.msra.mxu0 0.0
  %118 = vmatpush.msra.mxu0 0.0
  %119 = vmatpush.msra.mxu0 0.0
  %120 = vmatpush.msra.mxu0 0.0
  %121 = vmatpush.msra.mxu0 0.0
  %122 = vmatpush.msra.mxu0 0.0
  %123 = vmatpush.msra.mxu0 0.0
  %124 = vmatpush.msra.mxu0 0.0
  %125 = vmatpush.msra.mxu0 0.0
  %126 = vmatpush.msra.mxu0 0.0
  %127 = vmatpush.msra.mxu0 0.0
  %128 = vmatpush.msra.mxu0 0.0
  %129 = vmatpush.msra.mxu0 0.0
  %130 = vmatpush.msra.mxu0 0.0
  %131 = vmatpush.msra.mxu0 0.0
  %132 = vmatpush.msra.mxu0 %v38
  %133 = vmatmul.f32.gmra.mxu0 %v53
  %v134 = vpop.f32.mrf.mxu0
  %v135 = vadd.f32 %v44, %v134
  %136 = vmatmul.f32.gmra.mxu0 %v56
  %v137 = vpop.f32.mrf.mxu0
  %v138 = vadd.f32 %v44, %v137
  %139 = vmatmul.f32.gmra.mxu0 %v59
  %v140 = vpop.f32.mrf.mxu0
  %v141 = vadd.f32 %v44, %v140
  %142 = vmatmul.f32.gmra.mxu0 %v62
  %v143 = vpop.f32.mrf.mxu0
  %v144 = vadd.f32 %v44, %v143
  %145 = vmatmul.f32.gmra.mxu0 %v65
  %v146 = vpop.f32.mrf.mxu0
  %v147 = vadd.f32 %v44, %v146
  %148 = vmatmul.f32.gmra.mxu0 %v68
  %v149 = vpop.f32.mrf.mxu0
  %v150 = vadd.f32 %v44, %v149
  %151 = vmatmul.f32.gmra.mxu0 %v71
  %v152 = vpop.f32.mrf.mxu0
  %v153 = vadd.f32 %v44, %v152
  %154 = vmatmul.f32.gmra.mxu0 %v74
  %v155 = vpop.f32.mrf.mxu0
  %v156 = vadd.f32 %v44, %v155
  %157 = vdwg.mxu0
  %158 = vmatpush.msra.mxu0 0.0
  %159 = vmatpush.msra.mxu0 0.0
  %160 = vmatpush.msra.mxu0 0.0
  %161 = vmatpush.msra.mxu0 0.0
  %162 = vmatpush.msra.mxu0 0.0
  %163 = vmatpush.msra.mxu0 0.0
  %164 = vmatpush.msra.mxu0 0.0
  %165 = vmatpush.msra.mxu0 0.0
  %166 = vmatpush.msra.mxu0 0.0
  %167 = vmatpush.msra.mxu0 0.0
  %168 = vmatpush.msra.mxu0 0.0
  %169 = vmatpush.msra.mxu0 0.0
  %170 = vmatpush.msra.mxu0 0.0
  %171 = vmatpush.msra.mxu0 0.0
  %172 = vmatpush.msra.mxu0 0.0
  %173 = vmatpush.msra.mxu0 %v39
  %174 = vmatmul.f32.gmra.mxu0 %v53
  %v175 = vpop.f32.mrf.mxu0
  %v176 = vadd.f32 %v45, %v175
  %177 = vmatmul.f32.gmra.mxu0 %v56
  %v178 = vpop.f32.mrf.mxu0
  %v179 = vadd.f32 %v45, %v178
  %180 = vmatmul.f32.gmra.mxu0 %v59
  %v181 = vpop.f32.mrf.mxu0
  %v182 = vadd.f32 %v45, %v181
  %183 = vmatmul.f32.gmra.mxu0 %v62
  %v184 = vpop.f32.mrf.mxu0
  %v185 = vadd.f32 %v45, %v184
  %186 = vmatmul.f32.gmra.mxu0 %v65
  %v187 = vpop.f32.mrf.mxu0
  %v188 = vadd.f32 %v45, %v187
  %189 = vmatmul.f32.gmra.mxu0 %v68
  %v190 = vpop.f32.mrf.mxu0
  %v191 = vadd.f32 %v45, %v190
  %192 = vmatmul.f32.gmra.mxu0 %v71
  %v193 = vpop.f32.mrf.mxu0
  %v194 = vadd.f32 %v45, %v193
  %195 = vmatmul.f32.gmra.mxu0 %v74
  %v196 = vpop.f32.mrf.mxu0
  %v197 = vadd.f32 %v45, %v196
  %198 = vdwg.mxu0
  %199 = vmatpush.msra.mxu0 0.0
  %200 = vmatpush.msra.mxu0 0.0
  %201 = vmatpush.msra.mxu0 0.0
  %202 = vmatpush.msra.mxu0 0.0
  %203 = vmatpush.msra.mxu0 0.0
  %204 = vmatpush.msra.mxu0 0.0
  %205 = vmatpush.msra.mxu0 0.0
  %206 = vmatpush.msra.mxu0 0.0
  %207 = vmatpush.msra.mxu0 0.0
  %208 = vmatpush.msra.mxu0 0.0
  %209 = vmatpush.msra.mxu0 0.0
  %210 = vmatpush.msra.mxu0 0.0
  %211 = vmatpush.msra.mxu0 0.0
  %212 = vmatpush.msra.mxu0 0.0
  %213 = vmatpush.msra.mxu0 0.0
  %214 = vmatpush.msra.mxu0 %v40
  %215 = vmatmul.f32.gmra.mxu0 %v53
  %v216 = vpop.f32.mrf.mxu0
  %v217 = vadd.f32 %v46, %v216
  %218 = vmatmul.f32.gmra.mxu0 %v56
  %v219 = vpop.f32.mrf.mxu0
  %v220 = vadd.f32 %v46, %v219
  %221 = vmatmul.f32.gmra.mxu0 %v59
  %v222 = vpop.f32.mrf.mxu0
  %v223 = vadd.f32 %v46, %v222
  %224 = vmatmul.f32.gmra.mxu0 %v62
  %v225 = vpop.f32.mrf.mxu0
  %v226 = vadd.f32 %v46, %v225
  %227 = vmatmul.f32.gmra.mxu0 %v65
  %v228 = vpop.f32.mrf.mxu0
  %v229 = vadd.f32 %v46, %v228
  %230 = vmatmul.f32.gmra.mxu0 %v68
  %v231 = vpop.f32.mrf.mxu0
  %v232 = vadd.f32 %v46, %v231
  %233 = vmatmul.f32.gmra.mxu0 %v71
  %v234 = vpop.f32.mrf.mxu0
  %v235 = vadd.f32 %v46, %v234
  %236 = vmatmul.f32.gmra.mxu0 %v74
  %v237 = vpop.f32.mrf.mxu0
  %v238 = vadd.f32 %v46, %v237
  %239 = vdwg.mxu0
  %240 = vst [vmem:[#allocation2] sm:$0xff] %v94
  %241 = vst [vmem:[#allocation2 + $0x8] sm:$0xff] %v135
  %242 = vst [vmem:[#allocation2 + $0x10] sm:$0xff] %v176
  %243 = vst [vmem:[#allocation2 + $0x18] sm:$0xff] %v217
  %244 = vst [vmem:[#allocation2 + $0x20] sm:$0xff] %v97
  %245 = vst [vmem:[#allocation2 + $0x28] sm:$0xff] %v138
  %246 = vst [vmem:[#allocation2 + $0x30] sm:$0xff] %v179
  %247 = vst [vmem:[#allocation2 + $0x38] sm:$0xff] %v220
  %248 = vst [vmem:[#allocation2 + $0x40] sm:$0xff] %v100
  %249 = vst [vmem:[#allocation2 + $0x48] sm:$0xff] %v141
  %250 = vst [vmem:[#allocation2 + $0x50] sm:$0xff] %v182
  %251 = vst [vmem:[#allocation2 + $0x58] sm:$0xff] %v223
  %252 = vst [vmem:[#allocation2 + $0x60] sm:$0xff] %v103
  %253 = vst [vmem:[#allocation2 + $0x68] sm:$0xff] %v144
  %254 = vst [vmem:[#allocation2 + $0x70] sm:$0xff] %v185
  %255 = vst [vmem:[#allocation2 + $0x78] sm:$0xff] %v226
  %256 = vst [vmem:[#allocation2 + $0x80] sm:$0xff] %v106
  %257 = vst [vmem:[#allocation2 + $0x88] sm:$0xff] %v147
  %258 = vst [vmem:[#allocation2 + $0x90] sm:$0xff] %v188
  %259 = vst [vmem:[#allocation2 + $0x98] sm:$0xff] %v229
  %260 = vst [vmem:[#allocation2 + $0xa0] sm:$0xff] %v109
  %261 = vst [vmem:[#allocation2 + $0xa8] sm:$0xff] %v150
  %262 = vst [vmem:[#allocation2 + $0xb0] sm:$0xff] %v191
  %263 = vst [vmem:[#allocation2 + $0xb8] sm:$0xff] %v232
  %264 = vst [vmem:[#allocation2 + $0xc0] sm:$0xff] %v112
  %265 = vst [vmem:[#allocation2 + $0xc8] sm:$0xff] %v153
  %266 = vst [vmem:[#allocation2 + $0xd0] sm:$0xff] %v194
  %267 = vst [vmem:[#allocation2 + $0xd8] sm:$0xff] %v235
  %268 = vst [vmem:[#allocation2 + $0xe0] sm:$0xff] %v115
  %269 = vst [vmem:[#allocation2 + $0xe8] sm:$0xff] %v156
  %270 = vst [vmem:[#allocation2 + $0xf0] sm:$0xff] %v197
  %271 = vst [vmem:[#allocation2 + $0xf8] sm:$0xff] %v238
  %v272 = vld [vmem:[#allocation2] sm:$0xff]
  %v273 = vld [vmem:[#allocation2 + $0x8] sm:$0xff]
  %v274 = vld [vmem:[#allocation2 + $0x10] sm:$0xff]
  %v275 = vld [vmem:[#allocation2 + $0x18] sm:$0xff]
  %v276 = vld [vmem:[%s2] sm:$0xff]
  %v277 = vld [vmem:[%s2 + $0x8] sm:$0xff]
  %v278 = vld [vmem:[%s2 + $0x10] sm:$0xff]
  %v279 = vld [vmem:[%s2 + $0x18] sm:$0xff]
  %v280 = vld [vmem:[%s2 + $0x20] sm:$0xff]
  %v281 = vld [vmem:[%s2 + $0x28] sm:$0xff]
  %v282 = vld [vmem:[%s2 + $0x30] sm:$0xff]
  %v283 = vld [vmem:[%s2 + $0x38] sm:$0xff]
  %v284 = vld [vmem:[%s2 + $0x40] sm:$0xff]
  %v285 = vld [vmem:[%s2 + $0x48] sm:$0xff]
  %v286 = vld [vmem:[%s2 + $0x50] sm:$0xff]
  %v287 = vld [vmem:[%s2 + $0x58] sm:$0xff]
  %v288 = vld [vmem:[%s2 + $0x60] sm:$0xff]
  %v289 = vld [vmem:[%s2 + $0x68] sm:$0xff]
  %v290 = vld [vmem:[%s2 + $0x70] sm:$0xff]
  %v291 = vld [vmem:[%s2 + $0x78] sm:$0xff]
  %v292 = vld [vmem:[%s2 + $0x80] sm:$0xff]
  %v293 = vld [vmem:[%s2 + $0x88] sm:$0xff]
  %v294 = vld [vmem:[%s2 + $0x90] sm:$0xff]
  %v295 = vld [vmem:[%s2 + $0x98] sm:$0xff]
  %v296 = vld [vmem:[%s2 + $0xa0] sm:$0xff]
  %v297 = vld [vmem:[%s2 + $0xa8] sm:$0xff]
  %v298 = vld [vmem:[%s2 + $0xb0] sm:$0xff]
  %v299 = vld [vmem:[%s2 + $0xb8] sm:$0xff]
  %v300 = vld [vmem:[%s2 + $0xc0] sm:$0xff]
  %v301 = vld [vmem:[%s2 + $0xc8] sm:$0xff]
  %v302 = vld [vmem:[%s2 + $0xd0] sm:$0xff]
  %v303 = vld [vmem:[%s2 + $0xd8] sm:$0xff]
  %v304 = vld [vmem:[%s2 + $0xe0] sm:$0xff]
  %v305 = vld [vmem:[%s2 + $0xe8] sm:$0xff]
  %v306 = vld [vmem:[%s2 + $0xf0] sm:$0xff]
  %v307 = vld [vmem:[%s2 + $0xf8] sm:$0xff]
  %v308 = vld [vmem:[%s2 + $0x100] sm:$0xff]
  %v309 = vld [vmem:[%s2 + $0x108] sm:$0xff]
  %v310 = vld [vmem:[%s2 + $0x110] sm:$0xff]
  %v311 = vld [vmem:[%s2 + $0x118] sm:$0xff]
  %v312 = vld [vmem:[%s2 + $0x120] sm:$0xff]
  %v313 = vld [vmem:[%s2 + $0x128] sm:$0xff]
  %v314 = vld [vmem:[%s2 + $0x130] sm:$0xff]
  %v315 = vld [vmem:[%s2 + $0x138] sm:$0xff]
  %v316 = vld [vmem:[%s2 + $0x140] sm:$0xff]
  %v317 = vld [vmem:[%s2 + $0x148] sm:$0xff]
  %v318 = vld [vmem:[%s2 + $0x150] sm:$0xff]
  %v319 = vld [vmem:[%s2 + $0x158] sm:$0xff]
  %v320 = vld [vmem:[%s2 + $0x160] sm:$0xff]
  %v321 = vld [vmem:[%s2 + $0x168] sm:$0xff]
  %v322 = vld [vmem:[%s2 + $0x170] sm:$0xff]
  %v323 = vld [vmem:[%s2 + $0x178] sm:$0xff]
  %v324 = vld [vmem:[%s2 + $0x180] sm:$0xff]
  %v325 = vld [vmem:[%s2 + $0x188] sm:$0xff]
  %v326 = vld [vmem:[%s2 + $0x190] sm:$0xff]
  %v327 = vld [vmem:[%s2 + $0x198] sm:$0xff]
  %v328 = vld [vmem:[%s2 + $0x1a0] sm:$0xff]
  %v329 = vld [vmem:[%s2 + $0x1a8] sm:$0xff]
  %v330 = vld [vmem:[%s2 + $0x1b0] sm:$0xff]
  %v331 = vld [vmem:[%s2 + $0x1b8] sm:$0xff]
  %v332 = vld [vmem:[%s2 + $0x1c0] sm:$0xff]
  %v333 = vld [vmem:[%s2 + $0x1c8] sm:$0xff]
  %v334 = vld [vmem:[%s2 + $0x1d0] sm:$0xff]
  %v335 = vld [vmem:[%s2 + $0x1d8] sm:$0xff]
  %v336 = vld [vmem:[%s2 + $0x1e0] sm:$0xff]
  %v337 = vld [vmem:[%s2 + $0x1e8] sm:$0xff]
  %v338 = vld [vmem:[%s2 + $0x1f0] sm:$0xff]
  %v339 = vld [vmem:[%s2 + $0x1f8] sm:$0xff]
  %340 = vmatpush.msra.mxu0 %v336
  %341 = vmatpush.msra.mxu0 %v332
  %342 = vmatpush.msra.mxu0 %v328
  %343 = vmatpush.msra.mxu0 %v324
  %344 = vmatpush.msra.mxu0 %v320
  %345 = vmatpush.msra.mxu0 %v316
  %346 = vmatpush.msra.mxu0 %v312
  %347 = vmatpush.msra.mxu0 %v308
  %348 = vmatpush.msra.mxu0 %v304
  %349 = vmatpush.msra.mxu0 %v300
  %350 = vmatpush.msra.mxu0 %v296
  %351 = vmatpush.msra.mxu0 %v292
  %352 = vmatpush.msra.mxu0 %v288
  %353 = vmatpush.msra.mxu0 %v284
  %354 = vmatpush.msra.mxu0 %v280
  %355 = vmatpush.msra.mxu0 %v276
  %356 = vmatmul.f32.gmra.mxu0 0.0
  %v357 = vpop.f32.mrf.mxu0
  %v358 = vadd.f32 0.0, %v357
  %359 = vdwg.mxu0
  %360 = vmatpush.msra.mxu0 %v337
  %361 = vmatpush.msra.mxu0 %v333
  %362 = vmatpush.msra.mxu0 %v329
  %363 = vmatpush.msra.mxu0 %v325
  %364 = vmatpush.msra.mxu0 %v321
  %365 = vmatpush.msra.mxu0 %v317
  %366 = vmatpush.msra.mxu0 %v313
  %367 = vmatpush.msra.mxu0 %v309
  %368 = vmatpush.msra.mxu0 %v305
  %369 = vmatpush.msra.mxu0 %v301
  %370 = vmatpush.msra.mxu0 %v297
  %371 = vmatpush.msra.mxu0 %v293
  %372 = vmatpush.msra.mxu0 %v289
  %373 = vmatpush.msra.mxu0 %v285
  %374 = vmatpush.msra.mxu0 %v281
  %375 = vmatpush.msra.mxu0 %v277
  %376 = vmatmul.f32.gmra.mxu0 0.0
  %v377 = vpop.f32.mrf.mxu0
  %v378 = vadd.f32 0.0, %v377
  %379 = vdwg.mxu0
  %380 = vmatpush.msra.mxu0 %v338
  %381 = vmatpush.msra.mxu0 %v334
  %382 = vmatpush.msra.mxu0 %v330
  %383 = vmatpush.msra.mxu0 %v326
  %384 = vmatpush.msra.mxu0 %v322
  %385 = vmatpush.msra.mxu0 %v318
  %386 = vmatpush.msra.mxu0 %v314
  %387 = vmatpush.msra.mxu0 %v310
  %388 = vmatpush.msra.mxu0 %v306
  %389 = vmatpush.msra.mxu0 %v302
  %390 = vmatpush.msra.mxu0 %v298
  %391 = vmatpush.msra.mxu0 %v294
  %392 = vmatpush.msra.mxu0 %v290
  %393 = vmatpush.msra.mxu0 %v286
  %394 = vmatpush.msra.mxu0 %v282
  %395 = vmatpush.msra.mxu0 %v278
  %396 = vmatmul.f32.gmra.mxu0 0.0
  %v397 = vpop.f32.mrf.mxu0
  %v398 = vadd.f32 0.0, %v397
  %399 = vdwg.mxu0
  %400 = vmatpush.msra.mxu0 %v339
  %401 = vmatpush.msra.mxu0 %v335
  %402 = vmatpush.msra.mxu0 %v331
  %403 = vmatpush.msra.mxu0 %v327
  %404 = vmatpush.msra.mxu0 %v323
  %405 = vmatpush.msra.mxu0 %v319
  %406 = vmatpush.msra.mxu0 %v315
  %407 = vmatpush.msra.mxu0 %v311
  %408 = vmatpush.msra.mxu0 %v307
  %409 = vmatpush.msra.mxu0 %v303
  %410 = vmatpush.msra.mxu0 %v299
  %411 = vmatpush.msra.mxu0 %v295
  %412 = vmatpush.msra.mxu0 %v291
  %413 = vmatpush.msra.mxu0 %v287
  %414 = vmatpush.msra.mxu0 %v283
  %415 = vmatpush.msra.mxu0 %v279
  %416 = vmatmul.f32.gmra.mxu0 0.0
  %v417 = vpop.f32.mrf.mxu0
  %v418 = vadd.f32 0.0, %v417
  %419 = vdwg.mxu0
  %v420 = vadd.f32 %v272, %v358
  %v421 = vadd.f32 %v273, %v378
  %v422 = vadd.f32 %v274, %v398
  %v423 = vadd.f32 %v275, %v418
  %v424 = vxor.u32 %v420, 2147483648
  %v425 = vxor.u32 %v421, 2147483648
  %v426 = vxor.u32 %v422, 2147483648
  %v427 = vmul.f32 %v424, 1.442695
  %v428 = vpow.pop %v427
  %v429 = vmul.f32 %v425, 1.442695
  %v430 = vpow.pop %v429
  %v431 = vmul.f32 %v426, 1.442695
  %v432 = vpow.pop %v431
  %v433 = vadd.f32 %v428, 1.0
  %v434 = vadd.f32 %v430, 1.0
  %v435 = vadd.f32 %v432, 1.0
  %v436 = vrcp.pop %v433
  %v437 = vmul.f32 %v433, %v436
  %v438 = vsub.f32 1.0, %v437
  %v439 = vmul.f32 %v436, %v438
  %v440 = vadd.f32 %v436, %v439
  %vm441 = vweird.f32 %v433
  %vm442 = vweird.f32 %v436
  %vm443 = vmor %vm441, %vm442
  %v444 = vsel %vm443, %v436, %v440
  %v445 = vand.u32 2147483647, %v433
  %vm446 = vcmp.eq.f32.partialorder %v445, 8.507059e+37
  %v447 = vand.u32 %v433, 2147483648
  %v448 = vor.u32 1.1754944e-38, %v447
  %v449 = vsel %vm446, %v448, %v444
  %v450 = vmul.f32 1.0, %v449
  %v451 = vrcp.pop %v434
  %v452 = vmul.f32 %v434, %v451
  %v453 = vsub.f32 1.0, %v452
  %v454 = vmul.f32 %v451, %v453
  %v455 = vadd.f32 %v451, %v454
  %vm456 = vweird.f32 %v434
  %vm457 = vweird.f32 %v451
  %vm458 = vmor %vm456, %vm457
  %v459 = vsel %vm458, %v451, %v455
  %v460 = vand.u32 2147483647, %v434
  %vm461 = vcmp.eq.f32.partialorder %v460, 8.507059e+37
  %v462 = vand.u32 %v434, 2147483648
  %v463 = vor.u32 1.1754944e-38, %v462
  %v464 = vsel %vm461, %v463, %v459
  %v465 = vmul.f32 1.0, %v464
  %v466 = vrcp.pop %v435
  %v467 = vmul.f32 %v435, %v466
  %v468 = vsub.f32 1.0, %v467
  %v469 = vmul.f32 %v466, %v468
  %v470 = vadd.f32 %v466, %v469
  %vm471 = vweird.f32 %v435
  %vm472 = vweird.f32 %v466
  %vm473 = vmor %vm471, %vm472
  %v474 = vsel %vm473, %v466, %v470
  %v475 = vand.u32 2147483647, %v435
  %vm476 = vcmp.eq.f32.partialorder %v475, 8.507059e+37
  %v477 = vand.u32 %v435, 2147483648
  %v478 = vor.u32 1.1754944e-38, %v477
  %v479 = vsel %vm476, %v478, %v474
  %v480 = vmul.f32 1.0, %v479
  %v481 = vtanh.pop %v423
  %v482 = vmul.f32 %v465, 0.0
  %v483 = vmul.f32 %v450, %v481
  %v484 = vadd.f32 %v482, %v483
  %v485 = vtanh.pop %v484
  %v486 = vmul.f32 %v480, %v485
  %s487 = scalar_lea.vmem [#allocation2], 32
  %v488 = vld [vmem:[%s487] sm:$0xff]
  %v489 = vld [vmem:[%s487 + $0x8] sm:$0xff]
  %v490 = vld [vmem:[%s487 + $0x10] sm:$0xff]
  %v491 = vld [vmem:[%s487 + $0x18] sm:$0xff]
  %492 = vmatpush.msra.mxu0 %v336
  %493 = vmatpush.msra.mxu0 %v332
  %494 = vmatpush.msra.mxu0 %v328
  %495 = vmatpush.msra.mxu0 %v324
  %496 = vmatpush.msra.mxu0 %v320
  %497 = vmatpush.msra.mxu0 %v316
  %498 = vmatpush.msra.mxu0 %v312
  %499 = vmatpush.msra.mxu0 %v308
  %500 = vmatpush.msra.mxu0 %v304
  %501 = vmatpush.msra.mxu0 %v300
  %502 = vmatpush.msra.mxu0 %v296
  %503 = vmatpush.msra.mxu0 %v292
  %504 = vmatpush.msra.mxu0 %v288
  %505 = vmatpush.msra.mxu0 %v284
  %506 = vmatpush.msra.mxu0 %v280
  %507 = vmatpush.msra.mxu0 %v276
  %508 = vmatmul.f32.gmra.mxu0 %v486
  %v509 = vpop.f32.mrf.mxu0
  %v510 = vadd.f32 0.0, %v509
  %511 = vdwg.mxu0
  %512 = vmatpush.msra.mxu0 %v337
  %513 = vmatpush.msra.mxu0 %v333
  %514 = vmatpush.msra.mxu0 %v329
  %515 = vmatpush.msra.mxu0 %v325
  %516 = vmatpush.msra.mxu0 %v321
  %517 = vmatpush.msra.mxu0 %v317
  %518 = vmatpush.msra.mxu0 %v313
  %519 = vmatpush.msra.mxu0 %v309
  %520 = vmatpush.msra.mxu0 %v305
  %521 = vmatpush.msra.mxu0 %v301
  %522 = vmatpush.msra.mxu0 %v297
  %523 = vmatpush.msra.mxu0 %v293
  %524 = vmatpush.msra.mxu0 %v289
  %525 = vmatpush.msra.mxu0 %v285
  %526 = vmatpush.msra.mxu0 %v281
  %527 = vmatpush.msra.mxu0 %v277
  %528 = vmatmul.f32.gmra.mxu0 %v486
  %v529 = vpop.f32.mrf.mxu0
  %v530 = vadd.f32 0.0, %v529
  %531 = vdwg.mxu0
  %532 = vmatpush.msra.mxu0 %v338
  %533 = vmatpush.msra.mxu0 %v334
  %534 = vmatpush.msra.mxu0 %v330
  %535 = vmatpush.msra.mxu0 %v326
  %536 = vmatpush.msra.mxu0 %v322
  %537 = vmatpush.msra.mxu0 %v318
  %538 = vmatpush.msra.mxu0 %v314
  %539 = vmatpush.msra.mxu0 %v310
  %540 = vmatpush.msra.mxu0 %v306
  %541 = vmatpush.msra.mxu0 %v302
  %542 = vmatpush.msra.mxu0 %v298
  %543 = vmatpush.msra.mxu0 %v294
  %544 = vmatpush.msra.mxu0 %v290
  %545 = vmatpush.msra.mxu0 %v286
  %546 = vmatpush.msra.mxu0 %v282
  %547 = vmatpush.msra.mxu0 %v278
  %548 = vmatmul.f32.gmra.mxu0 %v486
  %v549 = vpop.f32.mrf.mxu0
  %v550 = vadd.f32 0.0, %v549
  %551 = vdwg.mxu0
  %552 = vmatpush.msra.mxu0 %v339
  %553 = vmatpush.msra.mxu0 %v335
  %554 = vmatpush.msra.mxu0 %v331
  %555 = vmatpush.msra.mxu0 %v327
  %556 = vmatpush.msra.mxu0 %v323
  %557 = vmatpush.msra.mxu0 %v319
  %558 = vmatpush.msra.mxu0 %v315
  %559 = vmatpush.msra.mxu0 %v311
  %560 = vmatpush.msra.mxu0 %v307
  %561 = vmatpush.msra.mxu0 %v303
  %562 = vmatpush.msra.mxu0 %v299
  %563 = vmatpush.msra.mxu0 %v295
  %564 = vmatpush.msra.mxu0 %v291
  %565 = vmatpush.msra.mxu0 %v287
  %566 = vmatpush.msra.mxu0 %v283
  %567 = vmatpush.msra.mxu0 %v279
  %568 = vmatmul.f32.gmra.mxu0 %v486
  %v569 = vpop.f32.mrf.mxu0
  %v570 = vadd.f32 0.0, %v569
  %571 = vdwg.mxu0
  %v572 = vadd.f32 %v488, %v510
  %v573 = vadd.f32 %v489, %v530
  %v574 = vadd.f32 %v490, %v550
  %v575 = vadd.f32 %v491, %v570
  %v576 = vxor.u32 %v572, 2147483648
  %v577 = vxor.u32 %v573, 2147483648
  %v578 = vxor.u32 %v574, 2147483648
  %v579 = vmul.f32 %v576, 1.442695
  %v580 = vpow.pop %v579
  %v581 = vmul.f32 %v577, 1.442695
  %v582 = vpow.pop %v581
  %v583 = vmul.f32 %v578, 1.442695
  %v584 = vpow.pop %v583
  %v585 = vadd.f32 %v580, 1.0
  %v586 = vadd.f32 %v582, 1.0
  %v587 = vadd.f32 %v584, 1.0
  %v588 = vrcp.pop %v585
  %v589 = vmul.f32 %v585, %v588
  %v590 = vsub.f32 1.0, %v589
  %v591 = vmul.f32 %v588, %v590
  %v592 = vadd.f32 %v588, %v591
  %vm593 = vweird.f32 %v585
  %vm594 = vweird.f32 %v588
  %vm595 = vmor %vm593, %vm594
  %v596 = vsel %vm595, %v588, %v592
  %v597 = vand.u32 2147483647, %v585
  %vm598 = vcmp.eq.f32.partialorder %v597, 8.507059e+37
  %v599 = vand.u32 %v585, 2147483648
  %v600 = vor.u32 1.1754944e-38, %v599
  %v601 = vsel %vm598, %v600, %v596
  %v602 = vmul.f32 1.0, %v601
  %v603 = vrcp.pop %v586
  %v604 = vmul.f32 %v586, %v603
  %v605 = vsub.f32 1.0, %v604
  %v606 = vmul.f32 %v603, %v605
  %v607 = vadd.f32 %v603, %v606
  %vm608 = vweird.f32 %v586
  %vm609 = vweird.f32 %v603
  %vm610 = vmor %vm608, %vm609
  %v611 = vsel %vm610, %v603, %v607
  %v612 = vand.u32 2147483647, %v586
  %vm613 = vcmp.eq.f32.partialorder %v612, 8.507059e+37
  %v614 = vand.u32 %v586, 2147483648
  %v615 = vor.u32 1.1754944e-38, %v614
  %v616 = vsel %vm613, %v615, %v611
  %v617 = vmul.f32 1.0, %v616
  %v618 = vrcp.pop %v587
  %v619 = vmul.f32 %v587, %v618
  %v620 = vsub.f32 1.0, %v619
  %v621 = vmul.f32 %v618, %v620
  %v622 = vadd.f32 %v618, %v621
  %vm623 = vweird.f32 %v587
  %vm624 = vweird.f32 %v618
  %vm625 = vmor %vm623, %vm624
  %v626 = vsel %vm625, %v618, %v622
  %v627 = vand.u32 2147483647, %v587
  %vm628 = vcmp.eq.f32.partialorder %v627, 8.507059e+37
  %v629 = vand.u32 %v587, 2147483648
  %v630 = vor.u32 1.1754944e-38, %v629
  %v631 = vsel %vm628, %v630, %v626
  %v632 = vmul.f32 1.0, %v631
  %v633 = vtanh.pop %v575
  %v634 = vmul.f32 %v617, %v484
  %v635 = vmul.f32 %v602, %v633
  %v636 = vadd.f32 %v634, %v635
  %v637 = vtanh.pop %v636
  %v638 = vmul.f32 %v632, %v637
  %s639 = scalar_lea.vmem [#allocation2], 64
  %v640 = vld [vmem:[%s639] sm:$0xff]
  %v641 = vld [vmem:[%s639 + $0x8] sm:$0xff]
  %v642 = vld [vmem:[%s639 + $0x10] sm:$0xff]
  %v643 = vld [vmem:[%s639 + $0x18] sm:$0xff]
  %644 = vmatpush.msra.mxu0 %v336
  %645 = vmatpush.msra.mxu0 %v332
  %646 = vmatpush.msra.mxu0 %v328
  %647 = vmatpush.msra.mxu0 %v324
  %648 = vmatpush.msra.mxu0 %v320
  %649 = vmatpush.msra.mxu0 %v316
  %650 = vmatpush.msra.mxu0 %v312
  %651 = vmatpush.msra.mxu0 %v308
  %652 = vmatpush.msra.mxu0 %v304
  %653 = vmatpush.msra.mxu0 %v300
  %654 = vmatpush.msra.mxu0 %v296
  %655 = vmatpush.msra.mxu0 %v292
  %656 = vmatpush.msra.mxu0 %v288
  %657 = vmatpush.msra.mxu0 %v284
  %658 = vmatpush.msra.mxu0 %v280
  %659 = vmatpush.msra.mxu0 %v276
  %660 = vmatmul.f32.gmra.mxu0 %v638
  %v661 = vpop.f32.mrf.mxu0
  %v662 = vadd.f32 0.0, %v661
  %663 = vdwg.mxu0
  %664 = vmatpush.msra.mxu0 %v337
  %665 = vmatpush.msra.mxu0 %v333
  %666 = vmatpush.msra.mxu0 %v329
  %667 = vmatpush.msra.mxu0 %v325
  %668 = vmatpush.msra.mxu0 %v321
  %669 = vmatpush.msra.mxu0 %v317
  %670 = vmatpush.msra.mxu0 %v313
  %671 = vmatpush.msra.mxu0 %v309
  %672 = vmatpush.msra.mxu0 %v305
  %673 = vmatpush.msra.mxu0 %v301
  %674 = vmatpush.msra.mxu0 %v297
  %675 = vmatpush.msra.mxu0 %v293
  %676 = vmatpush.msra.mxu0 %v289
  %677 = vmatpush.msra.mxu0 %v285
  %678 = vmatpush.msra.mxu0 %v281
  %679 = vmatpush.msra.mxu0 %v277
  %680 = vmatmul.f32.gmra.mxu0 %v638
  %v681 = vpop.f32.mrf.mxu0
  %v682 = vadd.f32 0.0, %v681
  %683 = vdwg.mxu0
  %684 = vmatpush.msra.mxu0 %v338
  %685 = vmatpush.msra.mxu0 %v334
  %686 = vmatpush.msra.mxu0 %v330
  %687 = vmatpush.msra.mxu0 %v326
  %688 = vmatpush.msra.mxu0 %v322
  %689 = vmatpush.msra.mxu0 %v318
  %690 = vmatpush.msra.mxu0 %v314
  %691 = vmatpush.msra.mxu0 %v310
  %692 = vmatpush.msra.mxu0 %v306
  %693 = vmatpush.msra.mxu0 %v302
  %694 = vmatpush.msra.mxu0 %v298
  %695 = vmatpush.msra.mxu0 %v294
  %696 = vmatpush.msra.mxu0 %v290
  %697 = vmatpush.msra.mxu0 %v286
  %698 = vmatpush.msra.mxu0 %v282
  %699 = vmatpush.msra.mxu0 %v278
  %700 = vmatmul.f32.gmra.mxu0 %v638
  %v701 = vpop.f32.mrf.mxu0
  %v702 = vadd.f32 0.0, %v701
  %703 = vdwg.mxu0
  %704 = vmatpush.msra.mxu0 %v339
  %705 = vmatpush.msra.mxu0 %v335
  %706 = vmatpush.msra.mxu0 %v331
  %707 = vmatpush.msra.mxu0 %v327
  %708 = vmatpush.msra.mxu0 %v323
  %709 = vmatpush.msra.mxu0 %v319
  %710 = vmatpush.msra.mxu0 %v315
  %711 = vmatpush.msra.mxu0 %v311
  %712 = vmatpush.msra.mxu0 %v307
  %713 = vmatpush.msra.mxu0 %v303
  %714 = vmatpush.msra.mxu0 %v299
  %715 = vmatpush.msra.mxu0 %v295
  %716 = vmatpush.msra.mxu0 %v291
  %717 = vmatpush.msra.mxu0 %v287
  %718 = vmatpush.msra.mxu0 %v283
  %719 = vmatpush.msra.mxu0 %v279
  %720 = vmatmul.f32.gmra.mxu0 %v638
  %v721 = vpop.f32.mrf.mxu0
  %v722 = vadd.f32 0.0, %v721
  %723 = vdwg.mxu0
  %v724 = vadd.f32 %v640, %v662
  %v725 = vadd.f32 %v641, %v682
  %v726 = vadd.f32 %v642, %v702
  %v727 = vadd.f32 %v643, %v722
  %v728 = vxor.u32 %v724, 2147483648
  %v729 = vxor.u32 %v725, 2147483648
  %v730 = vxor.u32 %v726, 2147483648
  %v731 = vmul.f32 %v728, 1.442695
  %v732 = vpow.pop %v731
  %v733 = vmul.f32 %v729, 1.442695
  %v734 = vpow.pop %v733
  %v735 = vmul.f32 %v730, 1.442695
  %v736 = vpow.pop %v735
  %v737 = vadd.f32 %v732, 1.0
  %v738 = vadd.f32 %v734, 1.0
  %v739 = vadd.f32 %v736, 1.0
  %v740 = vrcp.pop %v737
  %v741 = vmul.f32 %v737, %v740
  %v742 = vsub.f32 1.0, %v741
  %v743 = vmul.f32 %v740, %v742
  %v744 = vadd.f32 %v740, %v743
  %vm745 = vweird.f32 %v737
  %vm746 = vweird.f32 %v740
  %vm747 = vmor %vm745, %vm746
  %v748 = vsel %vm747, %v740, %v744
  %v749 = vand.u32 2147483647, %v737
  %vm750 = vcmp.eq.f32.partialorder %v749, 8.507059e+37
  %v751 = vand.u32 %v737, 2147483648
  %v752 = vor.u32 1.1754944e-38, %v751
  %v753 = vsel %vm750, %v752, %v748
  %v754 = vmul.f32 1.0, %v753
  %v755 = vrcp.pop %v738
  %v756 = vmul.f32 %v738, %v755
  %v757 = vsub.f32 1.0, %v756
  %v758 = vmul.f32 %v755, %v757
  %v759 = vadd.f32 %v755, %v758
  %vm760 = vweird.f32 %v738
  %vm761 = vweird.f32 %v755
  %vm762 = vmor %vm760, %vm761
  %v763 = vsel %vm762, %v755, %v759
  %v764 = vand.u32 2147483647, %v738
  %vm765 = vcmp.eq.f32.partialorder %v764, 8.507059e+37
  %v766 = vand.u32 %v738, 2147483648
  %v767 = vor.u32 1.1754944e-38, %v766
  %v768 = vsel %vm765, %v767, %v763
  %v769 = vmul.f32 1.0, %v768
  %v770 = vrcp.pop %v739
  %v771 = vmul.f32 %v739, %v770
  %v772 = vsub.f32 1.0, %v771
  %v773 = vmul.f32 %v770, %v772
  %v774 = vadd.f32 %v770, %v773
  %vm775 = vweird.f32 %v739
  %vm776 = vweird.f32 %v770
  %vm777 = vmor %vm775, %vm776
  %v778 = vsel %vm777, %v770, %v774
  %v779 = vand.u32 2147483647, %v739
  %vm780 = vcmp.eq.f32.partialorder %v779, 8.507059e+37
  %v781 = vand.u32 %v739, 2147483648
  %v782 = vor.u32 1.1754944e-38, %v781
  %v783 = vsel %vm780, %v782, %v778
  %v784 = vmul.f32 1.0, %v783
  %v785 = vtanh.pop %v727
  %v786 = vmul.f32 %v769, %v636
  %v787 = vmul.f32 %v754, %v785
  %v788 = vadd.f32 %v786, %v787
  %v789 = vtanh.pop %v788
  %v790 = vmul.f32 %v784, %v789
  %s791 = scalar_lea.vmem [#allocation2], 96
  %v792 = vld [vmem:[%s791] sm:$0xff]
  %v793 = vld [vmem:[%s791 + $0x8] sm:$0xff]
  %v794 = vld [vmem:[%s791 + $0x10] sm:$0xff]
  %v795 = vld [vmem:[%s791 + $0x18] sm:$0xff]
  %796 = vmatpush.msra.mxu0 %v336
  %797 = vmatpush.msra.mxu0 %v332
  %798 = vmatpush.msra.mxu0 %v328
  %799 = vmatpush.msra.mxu0 %v324
  %800 = vmatpush.msra.mxu0 %v320
  %801 = vmatpush.msra.mxu0 %v316
  %802 = vmatpush.msra.mxu0 %v312
  %803 = vmatpush.msra.mxu0 %v308
  %804 = vmatpush.msra.mxu0 %v304
  %805 = vmatpush.msra.mxu0 %v300
  %806 = vmatpush.msra.mxu0 %v296
  %807 = vmatpush.msra.mxu0 %v292
  %808 = vmatpush.msra.mxu0 %v288
  %809 = vmatpush.msra.mxu0 %v284
  %810 = vmatpush.msra.mxu0 %v280
  %811 = vmatpush.msra.mxu0 %v276
  %812 = vmatmul.f32.gmra.mxu0 %v790
  %v813 = vpop.f32.mrf.mxu0
  %v814 = vadd.f32 0.0, %v813
  %815 = vdwg.mxu0
  %816 = vmatpush.msra.mxu0 %v337
  %817 = vmatpush.msra.mxu0 %v333
  %818 = vmatpush.msra.mxu0 %v329
  %819 = vmatpush.msra.mxu0 %v325
  %820 = vmatpush.msra.mxu0 %v321
  %821 = vmatpush.msra.mxu0 %v317
  %822 = vmatpush.msra.mxu0 %v313
  %823 = vmatpush.msra.mxu0 %v309
  %824 = vmatpush.msra.mxu0 %v305
  %825 = vmatpush.msra.mxu0 %v301
  %826 = vmatpush.msra.mxu0 %v297
  %827 = vmatpush.msra.mxu0 %v293
  %828 = vmatpush.msra.mxu0 %v289
  %829 = vmatpush.msra.mxu0 %v285
  %830 = vmatpush.msra.mxu0 %v281
  %831 = vmatpush.msra.mxu0 %v277
  %832 = vmatmul.f32.gmra.mxu0 %v790
  %v833 = vpop.f32.mrf.mxu0
  %v834 = vadd.f32 0.0, %v833
  %835 = vdwg.mxu0
  %836 = vmatpush.msra.mxu0 %v338
  %837 = vmatpush.msra.mxu0 %v334
  %838 = vmatpush.msra.mxu0 %v330
  %839 = vmatpush.msra.mxu0 %v326
  %840 = vmatpush.msra.mxu0 %v322
  %841 = vmatpush.msra.mxu0 %v318
  %842 = vmatpush.msra.mxu0 %v314
  %843 = vmatpush.msra.mxu0 %v310
  %844 = vmatpush.msra.mxu0 %v306
  %845 = vmatpush.msra.mxu0 %v302
  %846 = vmatpush.msra.mxu0 %v298
  %847 = vmatpush.msra.mxu0 %v294
  %848 = vmatpush.msra.mxu0 %v290
  %849 = vmatpush.msra.mxu0 %v286
  %850 = vmatpush.msra.mxu0 %v282
  %851 = vmatpush.msra.mxu0 %v278
  %852 = vmatmul.f32.gmra.mxu0 %v790
  %v853 = vpop.f32.mrf.mxu0
  %v854 = vadd.f32 0.0, %v853
  %855 = vdwg.mxu0
  %856 = vmatpush.msra.mxu0 %v339
  %857 = vmatpush.msra.mxu0 %v335
  %858 = vmatpush.msra.mxu0 %v331
  %859 = vmatpush.msra.mxu0 %v327
  %860 = vmatpush.msra.mxu0 %v323
  %861 = vmatpush.msra.mxu0 %v319
  %862 = vmatpush.msra.mxu0 %v315
  %863 = vmatpush.msra.mxu0 %v311
  %864 = vmatpush.msra.mxu0 %v307
  %865 = vmatpush.msra.mxu0 %v303
  %866 = vmatpush.msra.mxu0 %v299
  %867 = vmatpush.msra.mxu0 %v295
  %868 = vmatpush.msra.mxu0 %v291
  %869 = vmatpush.msra.mxu0 %v287
  %870 = vmatpush.msra.mxu0 %v283
  %871 = vmatpush.msra.mxu0 %v279
  %872 = vmatmul.f32.gmra.mxu0 %v790
  %v873 = vpop.f32.mrf.mxu0
  %v874 = vadd.f32 0.0, %v873
  %875 = vdwg.mxu0
  %v876 = vadd.f32 %v792, %v814
  %v877 = vadd.f32 %v793, %v834
  %v878 = vadd.f32 %v794, %v854
  %v879 = vadd.f32 %v795, %v874
  %v880 = vxor.u32 %v876, 2147483648
  %v881 = vxor.u32 %v877, 2147483648
  %v882 = vxor.u32 %v878, 2147483648
  %v883 = vmul.f32 %v880, 1.442695
  %v884 = vpow.pop %v883
  %v885 = vmul.f32 %v881, 1.442695
  %v886 = vpow.pop %v885
  %v887 = vmul.f32 %v882, 1.442695
  %v888 = vpow.pop %v887
  %v889 = vadd.f32 %v884, 1.0
  %v890 = vadd.f32 %v886, 1.0
  %v891 = vadd.f32 %v888, 1.0
  %v892 = vrcp.pop %v889
  %v893 = vmul.f32 %v889, %v892
  %v894 = vsub.f32 1.0, %v893
  %v895 = vmul.f32 %v892, %v894
  %v896 = vadd.f32 %v892, %v895
  %vm897 = vweird.f32 %v889
  %vm898 = vweird.f32 %v892
  %vm899 = vmor %vm897, %vm898
  %v900 = vsel %vm899, %v892, %v896
  %v901 = vand.u32 2147483647, %v889
  %vm902 = vcmp.eq.f32.partialorder %v901, 8.507059e+37
  %v903 = vand.u32 %v889, 2147483648
  %v904 = vor.u32 1.1754944e-38, %v903
  %v905 = vsel %vm902, %v904, %v900
  %v906 = vmul.f32 1.0, %v905
  %v907 = vrcp.pop %v890
  %v908 = vmul.f32 %v890, %v907
  %v909 = vsub.f32 1.0, %v908
  %v910 = vmul.f32 %v907, %v909
  %v911 = vadd.f32 %v907, %v910
  %vm912 = vweird.f32 %v890
  %vm913 = vweird.f32 %v907
  %vm914 = vmor %vm912, %vm913
  %v915 = vsel %vm914, %v907, %v911
  %v916 = vand.u32 2147483647, %v890
  %vm917 = vcmp.eq.f32.partialorder %v916, 8.507059e+37
  %v918 = vand.u32 %v890, 2147483648
  %v919 = vor.u32 1.1754944e-38, %v918
  %v920 = vsel %vm917, %v919, %v915
  %v921 = vmul.f32 1.0, %v920
  %v922 = vrcp.pop %v891
  %v923 = vmul.f32 %v891, %v922
  %v924 = vsub.f32 1.0, %v923
  %v925 = vmul.f32 %v922, %v924
  %v926 = vadd.f32 %v922, %v925
  %vm927 = vweird.f32 %v891
  %vm928 = vweird.f32 %v922
  %vm929 = vmor %vm927, %vm928
  %v930 = vsel %vm929, %v922, %v926
  %v931 = vand.u32 2147483647, %v891
  %vm932 = vcmp.eq.f32.partialorder %v931, 8.507059e+37
  %v933 = vand.u32 %v891, 2147483648
  %v934 = vor.u32 1.1754944e-38, %v933
  %v935 = vsel %vm932, %v934, %v930
  %v936 = vmul.f32 1.0, %v935
  %v937 = vtanh.pop %v879
  %v938 = vmul.f32 %v921, %v788
  %v939 = vmul.f32 %v906, %v937
  %v940 = vadd.f32 %v938, %v939
  %v941 = vtanh.pop %v940
  %v942 = vmul.f32 %v936, %v941
  %s943 = scalar_lea.vmem [#allocation2], 128
  %v944 = vld [vmem:[%s943] sm:$0xff]
  %v945 = vld [vmem:[%s943 + $0x8] sm:$0xff]
  %v946 = vld [vmem:[%s943 + $0x10] sm:$0xff]
  %v947 = vld [vmem:[%s943 + $0x18] sm:$0xff]
  %948 = vmatpush.msra.mxu0 %v336
  %949 = vmatpush.msra.mxu0 %v332
  %950 = vmatpush.msra.mxu0 %v328
  %951 = vmatpush.msra.mxu0 %v324
  %952 = vmatpush.msra.mxu0 %v320
  %953 = vmatpush.msra.mxu0 %v316
  %954 = vmatpush.msra.mxu0 %v312
  %955 = vmatpush.msra.mxu0 %v308
  %956 = vmatpush.msra.mxu0 %v304
  %957 = vmatpush.msra.mxu0 %v300
  %958 = vmatpush.msra.mxu0 %v296
  %959 = vmatpush.msra.mxu0 %v292
  %960 = vmatpush.msra.mxu0 %v288
  %961 = vmatpush.msra.mxu0 %v284
  %962 = vmatpush.msra.mxu0 %v280
  %963 = vmatpush.msra.mxu0 %v276
  %964 = vmatmul.f32.gmra.mxu0 %v942
  %v965 = vpop.f32.mrf.mxu0
  %v966 = vadd.f32 0.0, %v965
  %967 = vdwg.mxu0
  %968 = vmatpush.msra.mxu0 %v337
  %969 = vmatpush.msra.mxu0 %v333
  %970 = vmatpush.msra.mxu0 %v329
  %971 = vmatpush.msra.mxu0 %v325
  %972 = vmatpush.msra.mxu0 %v321
  %973 = vmatpush.msra.mxu0 %v317
  %974 = vmatpush.msra.mxu0 %v313
  %975 = vmatpush.msra.mxu0 %v309
  %976 = vmatpush.msra.mxu0 %v305
  %977 = vmatpush.msra.mxu0 %v301
  %978 = vmatpush.msra.mxu0 %v297
  %979 = vmatpush.msra.mxu0 %v293
  %980 = vmatpush.msra.mxu0 %v289
  %981 = vmatpush.msra.mxu0 %v285
  %982 = vmatpush.msra.mxu0 %v281
  %983 = vmatpush.msra.mxu0 %v277
  %984 = vmatmul.f32.gmra.mxu0 %v942
  %v985 = vpop.f32.mrf.mxu0
  %v986 = vadd.f32 0.0, %v985
  %987 = vdwg.mxu0
  %988 = vmatpush.msra.mxu0 %v338
  %989 = vmatpush.msra.mxu0 %v334
  %990 = vmatpush.msra.mxu0 %v330
  %991 = vmatpush.msra.mxu0 %v326
  %992 = vmatpush.msra.mxu0 %v322
  %993 = vmatpush.msra.mxu0 %v318
  %994 = vmatpush.msra.mxu0 %v314
  %995 = vmatpush.msra.mxu0 %v310
  %996 = vmatpush.msra.mxu0 %v306
  %997 = vmatpush.msra.mxu0 %v302
  %998 = vmatpush.msra.mxu0 %v298
  %999 = vmatpush.msra.mxu0 %v294
  %1000 = vmatpush.msra.mxu0 %v290
  %1001 = vmatpush.msra.mxu0 %v286
  %1002 = vmatpush.msra.mxu0 %v282
  %1003 = vmatpush.msra.mxu0 %v278
  %1004 = vmatmul.f32.gmra.mxu0 %v942
  %v1005 = vpop.f32.mrf.mxu0
  %v1006 = vadd.f32 0.0, %v1005
  %1007 = vdwg.mxu0
  %1008 = vmatpush.msra.mxu0 %v339
  %1009 = vmatpush.msra.mxu0 %v335
  %1010 = vmatpush.msra.mxu0 %v331
  %1011 = vmatpush.msra.mxu0 %v327
  %1012 = vmatpush.msra.mxu0 %v323
  %1013 = vmatpush.msra.mxu0 %v319
  %1014 = vmatpush.msra.mxu0 %v315
  %1015 = vmatpush.msra.mxu0 %v311
  %1016 = vmatpush.msra.mxu0 %v307
  %1017 = vmatpush.msra.mxu0 %v303
  %1018 = vmatpush.msra.mxu0 %v299
  %1019 = vmatpush.msra.mxu0 %v295
  %1020 = vmatpush.msra.mxu0 %v291
  %1021 = vmatpush.msra.mxu0 %v287
  %1022 = vmatpush.msra.mxu0 %v283
  %1023 = vmatpush.msra.mxu0 %v279
  %1024 = vmatmul.f32.gmra.mxu0 %v942
  %v1025 = vpop.f32.mrf.mxu0
  %v1026 = vadd.f32 0.0, %v1025
  %1027 = vdwg.mxu0
  %v1028 = vadd.f32 %v944, %v966
  %v1029 = vadd.f32 %v945, %v986
  %v1030 = vadd.f32 %v946, %v1006
  %v1031 = vadd.f32 %v947, %v1026
  %v1032 = vxor.u32 %v1028, 2147483648
  %v1033 = vxor.u32 %v1029, 2147483648
  %v1034 = vxor.u32 %v1030, 2147483648
  %v1035 = vmul.f32 %v1032, 1.442695
  %v1036 = vpow.pop %v1035
  %v1037 = vmul.f32 %v1033, 1.442695
  %v1038 = vpow.pop %v1037
  %v1039 = vmul.f32 %v1034, 1.442695
  %v1040 = vpow.pop %v1039
  %v1041 = vadd.f32 %v1036, 1.0
  %v1042 = vadd.f32 %v1038, 1.0
  %v1043 = vadd.f32 %v1040, 1.0
  %v1044 = vrcp.pop %v1041
  %v1045 = vmul.f32 %v1041, %v1044
  %v1046 = vsub.f32 1.0, %v1045
  %v1047 = vmul.f32 %v1044, %v1046
  %v1048 = vadd.f32 %v1044, %v1047
  %vm1049 = vweird.f32 %v1041
  %vm1050 = vweird.f32 %v1044
  %vm1051 = vmor %vm1049, %vm1050
  %v1052 = vsel %vm1051, %v1044, %v1048
  %v1053 = vand.u32 2147483647, %v1041
  %vm1054 = vcmp.eq.f32.partialorder %v1053, 8.507059e+37
  %v1055 = vand.u32 %v1041, 2147483648
  %v1056 = vor.u32 1.1754944e-38, %v1055
  %v1057 = vsel %vm1054, %v1056, %v1052
  %v1058 = vmul.f32 1.0, %v1057
  %v1059 = vrcp.pop %v1042
  %v1060 = vmul.f32 %v1042, %v1059
  %v1061 = vsub.f32 1.0, %v1060
  %v1062 = vmul.f32 %v1059, %v1061
  %v1063 = vadd.f32 %v1059, %v1062
  %vm1064 = vweird.f32 %v1042
  %vm1065 = vweird.f32 %v1059
  %vm1066 = vmor %vm1064, %vm1065
  %v1067 = vsel %vm1066, %v1059, %v1063
  %v1068 = vand.u32 2147483647, %v1042
  %vm1069 = vcmp.eq.f32.partialorder %v1068, 8.507059e+37
  %v1070 = vand.u32 %v1042, 2147483648
  %v1071 = vor.u32 1.1754944e-38, %v1070
  %v1072 = vsel %vm1069, %v1071, %v1067
  %v1073 = vmul.f32 1.0, %v1072
  %v1074 = vrcp.pop %v1043
  %v1075 = vmul.f32 %v1043, %v1074
  %v1076 = vsub.f32 1.0, %v1075
  %v1077 = vmul.f32 %v1074, %v1076
  %v1078 = vadd.f32 %v1074, %v1077
  %vm1079 = vweird.f32 %v1043
  %vm1080 = vweird.f32 %v1074
  %vm1081 = vmor %vm1079, %vm1080
  %v1082 = vsel %vm1081, %v1074, %v1078
  %v1083 = vand.u32 2147483647, %v1043
  %vm1084 = vcmp.eq.f32.partialorder %v1083, 8.507059e+37
  %v1085 = vand.u32 %v1043, 2147483648
  %v1086 = vor.u32 1.1754944e-38, %v1085
  %v1087 = vsel %vm1084, %v1086, %v1082
  %v1088 = vmul.f32 1.0, %v1087
  %v1089 = vtanh.pop %v1031
  %v1090 = vmul.f32 %v1073, %v940
  %v1091 = vmul.f32 %v1058, %v1089
  %v1092 = vadd.f32 %v1090, %v1091
  %v1093 = vtanh.pop %v1092
  %v1094 = vmul.f32 %v1088, %v1093
  %s1095 = scalar_lea.vmem [#allocation2], 160
  %v1096 = vld [vmem:[%s1095] sm:$0xff]
  %v1097 = vld [vmem:[%s1095 + $0x8] sm:$0xff]
  %v1098 = vld [vmem:[%s1095 + $0x10] sm:$0xff]
  %v1099 = vld [vmem:[%s1095 + $0x18] sm:$0xff]
  %1100 = vmatpush.msra.mxu0 %v336
  %1101 = vmatpush.msra.mxu0 %v332
  %1102 = vmatpush.msra.mxu0 %v328
  %1103 = vmatpush.msra.mxu0 %v324
  %1104 = vmatpush.msra.mxu0 %v320
  %1105 = vmatpush.msra.mxu0 %v316
  %1106 = vmatpush.msra.mxu0 %v312
  %1107 = vmatpush.msra.mxu0 %v308
  %1108 = vmatpush.msra.mxu0 %v304
  %1109 = vmatpush.msra.mxu0 %v300
  %1110 = vmatpush.msra.mxu0 %v296
  %1111 = vmatpush.msra.mxu0 %v292
  %1112 = vmatpush.msra.mxu0 %v288
  %1113 = vmatpush.msra.mxu0 %v284
  %1114 = vmatpush.msra.mxu0 %v280
  %1115 = vmatpush.msra.mxu0 %v276
  %1116 = vmatmul.f32.gmra.mxu0 %v1094
  %v1117 = vpop.f32.mrf.mxu0
  %v1118 = vadd.f32 0.0, %v1117
  %1119 = vdwg.mxu0
  %1120 = vmatpush.msra.mxu0 %v337
  %1121 = vmatpush.msra.mxu0 %v333
  %1122 = vmatpush.msra.mxu0 %v329
  %1123 = vmatpush.msra.mxu0 %v325
  %1124 = vmatpush.msra.mxu0 %v321
  %1125 = vmatpush.msra.mxu0 %v317
  %1126 = vmatpush.msra.mxu0 %v313
  %1127 = vmatpush.msra.mxu0 %v309
  %1128 = vmatpush.msra.mxu0 %v305
  %1129 = vmatpush.msra.mxu0 %v301
  %1130 = vmatpush.msra.mxu0 %v297
  %1131 = vmatpush.msra.mxu0 %v293
  %1132 = vmatpush.msra.mxu0 %v289
  %1133 = vmatpush.msra.mxu0 %v285
  %1134 = vmatpush.msra.mxu0 %v281
  %1135 = vmatpush.msra.mxu0 %v277
  %1136 = vmatmul.f32.gmra.mxu0 %v1094
  %v1137 = vpop.f32.mrf.mxu0
  %v1138 = vadd.f32 0.0, %v1137
  %1139 = vdwg.mxu0
  %1140 = vmatpush.msra.mxu0 %v338
  %1141 = vmatpush.msra.mxu0 %v334
  %1142 = vmatpush.msra.mxu0 %v330
  %1143 = vmatpush.msra.mxu0 %v326
  %1144 = vmatpush.msra.mxu0 %v322
  %1145 = vmatpush.msra.mxu0 %v318
  %1146 = vmatpush.msra.mxu0 %v314
  %1147 = vmatpush.msra.mxu0 %v310
  %1148 = vmatpush.msra.mxu0 %v306
  %1149 = vmatpush.msra.mxu0 %v302
  %1150 = vmatpush.msra.mxu0 %v298
  %1151 = vmatpush.msra.mxu0 %v294
  %1152 = vmatpush.msra.mxu0 %v290
  %1153 = vmatpush.msra.mxu0 %v286
  %1154 = vmatpush.msra.mxu0 %v282
  %1155 = vmatpush.msra.mxu0 %v278
  %1156 = vmatmul.f32.gmra.mxu0 %v1094
  %v1157 = vpop.f32.mrf.mxu0
  %v1158 = vadd.f32 0.0, %v1157
  %1159 = vdwg.mxu0
  %1160 = vmatpush.msra.mxu0 %v339
  %1161 = vmatpush.msra.mxu0 %v335
  %1162 = vmatpush.msra.mxu0 %v331
  %1163 = vmatpush.msra.mxu0 %v327
  %1164 = vmatpush.msra.mxu0 %v323
  %1165 = vmatpush.msra.mxu0 %v319
  %1166 = vmatpush.msra.mxu0 %v315
  %1167 = vmatpush.msra.mxu0 %v311
  %1168 = vmatpush.msra.mxu0 %v307
  %1169 = vmatpush.msra.mxu0 %v303
  %1170 = vmatpush.msra.mxu0 %v299
  %1171 = vmatpush.msra.mxu0 %v295
  %1172 = vmatpush.msra.mxu0 %v291
  %1173 = vmatpush.msra.mxu0 %v287
  %1174 = vmatpush.msra.mxu0 %v283
  %1175 = vmatpush.msra.mxu0 %v279
  %1176 = vmatmul.f32.gmra.mxu0 %v1094
  %v1177 = vpop.f32.mrf.mxu0
  %v1178 = vadd.f32 0.0, %v1177
  %1179 = vdwg.mxu0
  %v1180 = vadd.f32 %v1096, %v1118
  %v1181 = vadd.f32 %v1097, %v1138
  %v1182 = vadd.f32 %v1098, %v1158
  %v1183 = vadd.f32 %v1099, %v1178
  %v1184 = vxor.u32 %v1180, 2147483648
  %v1185 = vxor.u32 %v1181, 2147483648
  %v1186 = vxor.u32 %v1182, 2147483648
  %v1187 = vmul.f32 %v1184, 1.442695
  %v1188 = vpow.pop %v1187
  %v1189 = vmul.f32 %v1185, 1.442695
  %v1190 = vpow.pop %v1189
  %v1191 = vmul.f32 %v1186, 1.442695
  %v1192 = vpow.pop %v1191
  %v1193 = vadd.f32 %v1188, 1.0
  %v1194 = vadd.f32 %v1190, 1.0
  %v1195 = vadd.f32 %v1192, 1.0
  %v1196 = vrcp.pop %v1193
  %v1197 = vmul.f32 %v1193, %v1196
  %v1198 = vsub.f32 1.0, %v1197
  %v1199 = vmul.f32 %v1196, %v1198
  %v1200 = vadd.f32 %v1196, %v1199
  %vm1201 = vweird.f32 %v1193
  %vm1202 = vweird.f32 %v1196
  %vm1203 = vmor %vm1201, %vm1202
  %v1204 = vsel %vm1203, %v1196, %v1200
  %v1205 = vand.u32 2147483647, %v1193
  %vm1206 = vcmp.eq.f32.partialorder %v1205, 8.507059e+37
  %v1207 = vand.u32 %v1193, 2147483648
  %v1208 = vor.u32 1.1754944e-38, %v1207
  %v1209 = vsel %vm1206, %v1208, %v1204
  %v1210 = vmul.f32 1.0, %v1209
  %v1211 = vrcp.pop %v1194
  %v1212 = vmul.f32 %v1194, %v1211
  %v1213 = vsub.f32 1.0, %v1212
  %v1214 = vmul.f32 %v1211, %v1213
  %v1215 = vadd.f32 %v1211, %v1214
  %vm1216 = vweird.f32 %v1194
  %vm1217 = vweird.f32 %v1211
  %vm1218 = vmor %vm1216, %vm1217
  %v1219 = vsel %vm1218, %v1211, %v1215
  %v1220 = vand.u32 2147483647, %v1194
  %vm1221 = vcmp.eq.f32.partialorder %v1220, 8.507059e+37
  %v1222 = vand.u32 %v1194, 2147483648
  %v1223 = vor.u32 1.1754944e-38, %v1222
  %v1224 = vsel %vm1221, %v1223, %v1219
  %v1225 = vmul.f32 1.0, %v1224
  %v1226 = vrcp.pop %v1195
  %v1227 = vmul.f32 %v1195, %v1226
  %v1228 = vsub.f32 1.0, %v1227
  %v1229 = vmul.f32 %v1226, %v1228
  %v1230 = vadd.f32 %v1226, %v1229
  %vm1231 = vweird.f32 %v1195
  %vm1232 = vweird.f32 %v1226
  %vm1233 = vmor %vm1231, %vm1232
  %v1234 = vsel %vm1233, %v1226, %v1230
  %v1235 = vand.u32 2147483647, %v1195
  %vm1236 = vcmp.eq.f32.partialorder %v1235, 8.507059e+37
  %v1237 = vand.u32 %v1195, 2147483648
  %v1238 = vor.u32 1.1754944e-38, %v1237
  %v1239 = vsel %vm1236, %v1238, %v1234
  %v1240 = vmul.f32 1.0, %v1239
  %v1241 = vtanh.pop %v1183
  %v1242 = vmul.f32 %v1225, %v1092
  %v1243 = vmul.f32 %v1210, %v1241
  %v1244 = vadd.f32 %v1242, %v1243
  %v1245 = vtanh.pop %v1244
  %v1246 = vmul.f32 %v1240, %v1245
  %s1247 = scalar_lea.vmem [#allocation2], 192
  %v1248 = vld [vmem:[%s1247] sm:$0xff]
  %v1249 = vld [vmem:[%s1247 + $0x8] sm:$0xff]
  %v1250 = vld [vmem:[%s1247 + $0x10] sm:$0xff]
  %v1251 = vld [vmem:[%s1247 + $0x18] sm:$0xff]
  %1252 = vmatpush.msra.mxu0 %v336
  %1253 = vmatpush.msra.mxu0 %v332
  %1254 = vmatpush.msra.mxu0 %v328
  %1255 = vmatpush.msra.mxu0 %v324
  %1256 = vmatpush.msra.mxu0 %v320
  %1257 = vmatpush.msra.mxu0 %v316
  %1258 = vmatpush.msra.mxu0 %v312
  %1259 = vmatpush.msra.mxu0 %v308
  %1260 = vmatpush.msra.mxu0 %v304
  %1261 = vmatpush.msra.mxu0 %v300
  %1262 = vmatpush.msra.mxu0 %v296
  %1263 = vmatpush.msra.mxu0 %v292
  %1264 = vmatpush.msra.mxu0 %v288
  %1265 = vmatpush.msra.mxu0 %v284
  %1266 = vmatpush.msra.mxu0 %v280
  %1267 = vmatpush.msra.mxu0 %v276
  %1268 = vmatmul.f32.gmra.mxu0 %v1246
  %v1269 = vpop.f32.mrf.mxu0
  %v1270 = vadd.f32 0.0, %v1269
  %1271 = vdwg.mxu0
  %1272 = vmatpush.msra.mxu0 %v337
  %1273 = vmatpush.msra.mxu0 %v333
  %1274 = vmatpush.msra.mxu0 %v329
  %1275 = vmatpush.msra.mxu0 %v325
  %1276 = vmatpush.msra.mxu0 %v321
  %1277 = vmatpush.msra.mxu0 %v317
  %1278 = vmatpush.msra.mxu0 %v313
  %1279 = vmatpush.msra.mxu0 %v309
  %1280 = vmatpush.msra.mxu0 %v305
  %1281 = vmatpush.msra.mxu0 %v301
  %1282 = vmatpush.msra.mxu0 %v297
  %1283 = vmatpush.msra.mxu0 %v293
  %1284 = vmatpush.msra.mxu0 %v289
  %1285 = vmatpush.msra.mxu0 %v285
  %1286 = vmatpush.msra.mxu0 %v281
  %1287 = vmatpush.msra.mxu0 %v277
  %1288 = vmatmul.f32.gmra.mxu0 %v1246
  %v1289 = vpop.f32.mrf.mxu0
  %v1290 = vadd.f32 0.0, %v1289
  %1291 = vdwg.mxu0
  %1292 = vmatpush.msra.mxu0 %v338
  %1293 = vmatpush.msra.mxu0 %v334
  %1294 = vmatpush.msra.mxu0 %v330
  %1295 = vmatpush.msra.mxu0 %v326
  %1296 = vmatpush.msra.mxu0 %v322
  %1297 = vmatpush.msra.mxu0 %v318
  %1298 = vmatpush.msra.mxu0 %v314
  %1299 = vmatpush.msra.mxu0 %v310
  %1300 = vmatpush.msra.mxu0 %v306
  %1301 = vmatpush.msra.mxu0 %v302
  %1302 = vmatpush.msra.mxu0 %v298
  %1303 = vmatpush.msra.mxu0 %v294
  %1304 = vmatpush.msra.mxu0 %v290
  %1305 = vmatpush.msra.mxu0 %v286
  %1306 = vmatpush.msra.mxu0 %v282
  %1307 = vmatpush.msra.mxu0 %v278
  %1308 = vmatmul.f32.gmra.mxu0 %v1246
  %v1309 = vpop.f32.mrf.mxu0
  %v1310 = vadd.f32 0.0, %v1309
  %1311 = vdwg.mxu0
  %1312 = vmatpush.msra.mxu0 %v339
  %1313 = vmatpush.msra.mxu0 %v335
  %1314 = vmatpush.msra.mxu0 %v331
  %1315 = vmatpush.msra.mxu0 %v327
  %1316 = vmatpush.msra.mxu0 %v323
  %1317 = vmatpush.msra.mxu0 %v319
  %1318 = vmatpush.msra.mxu0 %v315
  %1319 = vmatpush.msra.mxu0 %v311
  %1320 = vmatpush.msra.mxu0 %v307
  %1321 = vmatpush.msra.mxu0 %v303
  %1322 = vmatpush.msra.mxu0 %v299
  %1323 = vmatpush.msra.mxu0 %v295
  %1324 = vmatpush.msra.mxu0 %v291
  %1325 = vmatpush.msra.mxu0 %v287
  %1326 = vmatpush.msra.mxu0 %v283
  %1327 = vmatpush.msra.mxu0 %v279
  %1328 = vmatmul.f32.gmra.mxu0 %v1246
  %v1329 = vpop.f32.mrf.mxu0
  %v1330 = vadd.f32 0.0, %v1329
  %1331 = vdwg.mxu0
  %v1332 = vadd.f32 %v1248, %v1270
  %v1333 = vadd.f32 %v1249, %v1290
  %v1334 = vadd.f32 %v1250, %v1310
  %v1335 = vadd.f32 %v1251, %v1330
  %v1336 = vxor.u32 %v1332, 2147483648
  %v1337 = vxor.u32 %v1333, 2147483648
  %v1338 = vxor.u32 %v1334, 2147483648
  %v1339 = vmul.f32 %v1336, 1.442695
  %v1340 = vpow.pop %v1339
  %v1341 = vmul.f32 %v1337, 1.442695
  %v1342 = vpow.pop %v1341
  %v1343 = vmul.f32 %v1338, 1.442695
  %v1344 = vpow.pop %v1343
  %v1345 = vadd.f32 %v1340, 1.0
  %v1346 = vadd.f32 %v1342, 1.0
  %v1347 = vadd.f32 %v1344, 1.0
  %v1348 = vrcp.pop %v1345
  %v1349 = vmul.f32 %v1345, %v1348
  %v1350 = vsub.f32 1.0, %v1349
  %v1351 = vmul.f32 %v1348, %v1350
  %v1352 = vadd.f32 %v1348, %v1351
  %vm1353 = vweird.f32 %v1345
  %vm1354 = vweird.f32 %v1348
  %vm1355 = vmor %vm1353, %vm1354
  %v1356 = vsel %vm1355, %v1348, %v1352
  %v1357 = vand.u32 2147483647, %v1345
  %vm1358 = vcmp.eq.f32.partialorder %v1357, 8.507059e+37
  %v1359 = vand.u32 %v1345, 2147483648
  %v1360 = vor.u32 1.1754944e-38, %v1359
  %v1361 = vsel %vm1358, %v1360, %v1356
  %v1362 = vmul.f32 1.0, %v1361
  %v1363 = vrcp.pop %v1346
  %v1364 = vmul.f32 %v1346, %v1363
  %v1365 = vsub.f32 1.0, %v1364
  %v1366 = vmul.f32 %v1363, %v1365
  %v1367 = vadd.f32 %v1363, %v1366
  %vm1368 = vweird.f32 %v1346
  %vm1369 = vweird.f32 %v1363
  %vm1370 = vmor %vm1368, %vm1369
  %v1371 = vsel %vm1370, %v1363, %v1367
  %v1372 = vand.u32 2147483647, %v1346
  %vm1373 = vcmp.eq.f32.partialorder %v1372, 8.507059e+37
  %v1374 = vand.u32 %v1346, 2147483648
  %v1375 = vor.u32 1.1754944e-38, %v1374
  %v1376 = vsel %vm1373, %v1375, %v1371
  %v1377 = vmul.f32 1.0, %v1376
  %v1378 = vrcp.pop %v1347
  %v1379 = vmul.f32 %v1347, %v1378
  %v1380 = vsub.f32 1.0, %v1379
  %v1381 = vmul.f32 %v1378, %v1380
  %v1382 = vadd.f32 %v1378, %v1381
  %vm1383 = vweird.f32 %v1347
  %vm1384 = vweird.f32 %v1378
  %vm1385 = vmor %vm1383, %vm1384
  %v1386 = vsel %vm1385, %v1378, %v1382
  %v1387 = vand.u32 2147483647, %v1347
  %vm1388 = vcmp.eq.f32.partialorder %v1387, 8.507059e+37
  %v1389 = vand.u32 %v1347, 2147483648
  %v1390 = vor.u32 1.1754944e-38, %v1389
  %v1391 = vsel %vm1388, %v1390, %v1386
  %v1392 = vmul.f32 1.0, %v1391
  %v1393 = vtanh.pop %v1335
  %v1394 = vmul.f32 %v1377, %v1244
  %v1395 = vmul.f32 %v1362, %v1393
  %v1396 = vadd.f32 %v1394, %v1395
  %v1397 = vtanh.pop %v1396
  %v1398 = vmul.f32 %v1392, %v1397
  %s1399 = scalar_lea.vmem [#allocation2], 224
  %v1400 = vld [vmem:[%s1399] sm:$0xff]
  %v1401 = vld [vmem:[%s1399 + $0x8] sm:$0xff]
  %v1402 = vld [vmem:[%s1399 + $0x10] sm:$0xff]
  %v1403 = vld [vmem:[%s1399 + $0x18] sm:$0xff]
  %1404 = vmatpush.msra.mxu0 %v336
  %1405 = vmatpush.msra.mxu0 %v332
  %1406 = vmatpush.msra.mxu0 %v328
  %1407 = vmatpush.msra.mxu0 %v324
  %1408 = vmatpush.msra.mxu0 %v320
  %1409 = vmatpush.msra.mxu0 %v316
  %1410 = vmatpush.msra.mxu0 %v312
  %1411 = vmatpush.msra.mxu0 %v308
  %1412 = vmatpush.msra.mxu0 %v304
  %1413 = vmatpush.msra.mxu0 %v300
  %1414 = vmatpush.msra.mxu0 %v296
  %1415 = vmatpush.msra.mxu0 %v292
  %1416 = vmatpush.msra.mxu0 %v288
  %1417 = vmatpush.msra.mxu0 %v284
  %1418 = vmatpush.msra.mxu0 %v280
  %1419 = vmatpush.msra.mxu0 %v276
  %1420 = vmatmul.f32.gmra.mxu0 %v1398
  %v1421 = vpop.f32.mrf.mxu0
  %v1422 = vadd.f32 0.0, %v1421
  %1423 = vdwg.mxu0
  %1424 = vmatpush.msra.mxu0 %v337
  %1425 = vmatpush.msra.mxu0 %v333
  %1426 = vmatpush.msra.mxu0 %v329
  %1427 = vmatpush.msra.mxu0 %v325
  %1428 = vmatpush.msra.mxu0 %v321
  %1429 = vmatpush.msra.mxu0 %v317
  %1430 = vmatpush.msra.mxu0 %v313
  %1431 = vmatpush.msra.mxu0 %v309
  %1432 = vmatpush.msra.mxu0 %v305
  %1433 = vmatpush.msra.mxu0 %v301
  %1434 = vmatpush.msra.mxu0 %v297
  %1435 = vmatpush.msra.mxu0 %v293
  %1436 = vmatpush.msra.mxu0 %v289
  %1437 = vmatpush.msra.mxu0 %v285
  %1438 = vmatpush.msra.mxu0 %v281
  %1439 = vmatpush.msra.mxu0 %v277
  %1440 = vmatmul.f32.gmra.mxu0 %v1398
  %v1441 = vpop.f32.mrf.mxu0
  %v1442 = vadd.f32 0.0, %v1441
  %1443 = vdwg.mxu0
  %1444 = vmatpush.msra.mxu0 %v338
  %1445 = vmatpush.msra.mxu0 %v334
  %1446 = vmatpush.msra.mxu0 %v330
  %1447 = vmatpush.msra.mxu0 %v326
  %1448 = vmatpush.msra.mxu0 %v322
  %1449 = vmatpush.msra.mxu0 %v318
  %1450 = vmatpush.msra.mxu0 %v314
  %1451 = vmatpush.msra.mxu0 %v310
  %1452 = vmatpush.msra.mxu0 %v306
  %1453 = vmatpush.msra.mxu0 %v302
  %1454 = vmatpush.msra.mxu0 %v298
  %1455 = vmatpush.msra.mxu0 %v294
  %1456 = vmatpush.msra.mxu0 %v290
  %1457 = vmatpush.msra.mxu0 %v286
  %1458 = vmatpush.msra.mxu0 %v282
  %1459 = vmatpush.msra.mxu0 %v278
  %1460 = vmatmul.f32.gmra.mxu0 %v1398
  %v1461 = vpop.f32.mrf.mxu0
  %v1462 = vadd.f32 0.0, %v1461
  %1463 = vdwg.mxu0
  %1464 = vmatpush.msra.mxu0 %v339
  %1465 = vmatpush.msra.mxu0 %v335
  %1466 = vmatpush.msra.mxu0 %v331
  %1467 = vmatpush.msra.mxu0 %v327
  %1468 = vmatpush.msra.mxu0 %v323
  %1469 = vmatpush.msra.mxu0 %v319
  %1470 = vmatpush.msra.mxu0 %v315
  %1471 = vmatpush.msra.mxu0 %v311
  %1472 = vmatpush.msra.mxu0 %v307
  %1473 = vmatpush.msra.mxu0 %v303
  %1474 = vmatpush.msra.mxu0 %v299
  %1475 = vmatpush.msra.mxu0 %v295
  %1476 = vmatpush.msra.mxu0 %v291
  %1477 = vmatpush.msra.mxu0 %v287
  %1478 = vmatpush.msra.mxu0 %v283
  %1479 = vmatpush.msra.mxu0 %v279
  %1480 = vmatmul.f32.gmra.mxu0 %v1398
  %v1481 = vpop.f32.mrf.mxu0
  %v1482 = vadd.f32 0.0, %v1481
  %1483 = vdwg.mxu0
  %v1484 = vadd.f32 %v1400, %v1422
  %v1485 = vadd.f32 %v1401, %v1442
  %v1486 = vadd.f32 %v1402, %v1462
  %v1487 = vadd.f32 %v1403, %v1482
  %v1488 = vxor.u32 %v1484, 2147483648
  %v1489 = vxor.u32 %v1485, 2147483648
  %v1490 = vxor.u32 %v1486, 2147483648
  %v1491 = vmul.f32 %v1488, 1.442695
  %v1492 = vpow.pop %v1491
  %v1493 = vmul.f32 %v1489, 1.442695
  %v1494 = vpow.pop %v1493
  %v1495 = vmul.f32 %v1490, 1.442695
  %v1496 = vpow.pop %v1495
  %v1497 = vadd.f32 %v1492, 1.0
  %v1498 = vadd.f32 %v1494, 1.0
  %v1499 = vadd.f32 %v1496, 1.0
  %v1500 = vrcp.pop %v1497
  %v1501 = vmul.f32 %v1497, %v1500
  %v1502 = vsub.f32 1.0, %v1501
  %v1503 = vmul.f32 %v1500, %v1502
  %v1504 = vadd.f32 %v1500, %v1503
  %vm1505 = vweird.f32 %v1497
  %vm1506 = vweird.f32 %v1500
  %vm1507 = vmor %vm1505, %vm1506
  %v1508 = vsel %vm1507, %v1500, %v1504
  %v1509 = vand.u32 2147483647, %v1497
  %vm1510 = vcmp.eq.f32.partialorder %v1509, 8.507059e+37
  %v1511 = vand.u32 %v1497, 2147483648
  %v1512 = vor.u32 1.1754944e-38, %v1511
  %v1513 = vsel %vm1510, %v1512, %v1508
  %v1514 = vmul.f32 1.0, %v1513
  %v1515 = vrcp.pop %v1498
  %v1516 = vmul.f32 %v1498, %v1515
  %v1517 = vsub.f32 1.0, %v1516
  %v1518 = vmul.f32 %v1515, %v1517
  %v1519 = vadd.f32 %v1515, %v1518
  %vm1520 = vweird.f32 %v1498
  %vm1521 = vweird.f32 %v1515
  %vm1522 = vmor %vm1520, %vm1521
  %v1523 = vsel %vm1522, %v1515, %v1519
  %v1524 = vand.u32 2147483647, %v1498
  %vm1525 = vcmp.eq.f32.partialorder %v1524, 8.507059e+37
  %v1526 = vand.u32 %v1498, 2147483648
  %v1527 = vor.u32 1.1754944e-38, %v1526
  %v1528 = vsel %vm1525, %v1527, %v1523
  %v1529 = vmul.f32 1.0, %v1528
  %v1530 = vrcp.pop %v1499
  %v1531 = vmul.f32 %v1499, %v1530
  %v1532 = vsub.f32 1.0, %v1531
  %v1533 = vmul.f32 %v1530, %v1532
  %v1534 = vadd.f32 %v1530, %v1533
  %vm1535 = vweird.f32 %v1499
  %vm1536 = vweird.f32 %v1530
  %vm1537 = vmor %vm1535, %vm1536
  %v1538 = vsel %vm1537, %v1530, %v1534
  %v1539 = vand.u32 2147483647, %v1499
  %vm1540 = vcmp.eq.f32.partialorder %v1539, 8.507059e+37
  %v1541 = vand.u32 %v1499, 2147483648
  %v1542 = vor.u32 1.1754944e-38, %v1541
  %v1543 = vsel %vm1540, %v1542, %v1538
  %v1544 = vmul.f32 1.0, %v1543
  %v1545 = vtanh.pop %v1487
  %v1546 = vmul.f32 %v1529, %v1396
  %v1547 = vmul.f32 %v1514, %v1545
  %v1548 = vadd.f32 %v1546, %v1547
  %v1549 = vtanh.pop %v1548
  %v1550 = vmul.f32 %v1544, %v1549
  %v1551 = vmax.f32 %v1550, 0.0
  %v1552 = vld [vmem:[%s4] sm:$0xff]
  %v1553 = vld [vmem:[%s4 + $0x8] sm:$0xff]
  %v1554 = vld [vmem:[%s4 + $0x10] sm:$0xff]
  %v1555 = vld [vmem:[%s4 + $0x18] sm:$0xff]
  %v1556 = vld [vmem:[%s4 + $0x20] sm:$0xff]
  %v1557 = vld [vmem:[%s4 + $0x28] sm:$0xff]
  %v1558 = vld [vmem:[%s4 + $0x30] sm:$0xff]
  %v1559 = vld [vmem:[%s4 + $0x38] sm:$0xff]
  %v1560 = vld [vmem:[%s4 + $0x40] sm:$0xff]
  %v1561 = vld [vmem:[%s4 + $0x48] sm:$0xff]
  %v1562 = vld [vmem:[%s4 + $0x50] sm:$0xff]
  %v1563 = vld [vmem:[%s4 + $0x58] sm:$0xff]
  %v1564 = vld [vmem:[%s4 + $0x60] sm:$0xff]
  %v1565 = vld [vmem:[%s4 + $0x68] sm:$0xff]
  %v1566 = vld [vmem:[%s4 + $0x70] sm:$0xff]
  %v1567 = vld [vmem:[%s4 + $0x78] sm:$0xff]
  %v1568 = vld [vmem:[%s5] sm:$0x1]
  %v1570 = vperm.slane %v1568, 0
  %1572 = vmatpush.msra.mxu0 %v1567
  %1573 = vmatpush.msra.mxu0 %v1566
  %1574 = vmatpush.msra.mxu0 %v1565
  %1575 = vmatpush.msra.mxu0 %v1564
  %1576 = vmatpush.msra.mxu0 %v1563
  %1577 = vmatpush.msra.mxu0 %v1562
  %1578 = vmatpush.msra.mxu0 %v1561
  %1579 = vmatpush.msra.mxu0 %v1560
  %1580 = vmatpush.msra.mxu0 %v1559
  %1581 = vmatpush.msra.mxu0 %v1558
  %1582 = vmatpush.msra.mxu0 %v1557
  %1583 = vmatpush.msra.mxu0 %v1556
  %1584 = vmatpush.msra.mxu0 %v1555
  %1585 = vmatpush.msra.mxu0 %v1554
  %1586 = vmatpush.msra.mxu0 %v1553
  %1587 = vmatpush.msra.mxu0 %v1552
  %1588 = vmatmul.f32.gmra.mxu0 %v1551
  %v1589 = vpop.f32.mrf.mxu0
  %v1590 = vadd.f32 %v1570, %v1589
  %1591 = vdwg.mxu0
  %v1592 = vmax.f32 %v1590, 0.0
  %v1593 = vld [vmem:[%s6] sm:$0xff]
  %v1594 = vld [vmem:[%s6 + $0x8] sm:$0xff]
  %v1595 = vld [vmem:[%s6 + $0x10] sm:$0xff]
  %v1596 = vld [vmem:[%s6 + $0x18] sm:$0xff]
  %v1597 = vld [vmem:[%s6 + $0x20] sm:$0xff]
  %v1598 = vld [vmem:[%s6 + $0x28] sm:$0xff]
  %v1599 = vld [vmem:[%s6 + $0x30] sm:$0xff]
  %v1600 = vld [vmem:[%s6 + $0x38] sm:$0xff]
  %v1601 = vld [vmem:[%s7] sm:$0x1]
  %v1603 = vperm.slane %v1601, 0
  %vm1605 = vcmask 523264
  %v1607 = vsel %vm1605, %v1592, 0
  %1609 = vmatpush.msra.mxu0 0.0
  %1610 = vmatpush.msra.mxu0 0.0
  %1611 = vmatpush.msra.mxu0 0.0
  %1612 = vmatpush.msra.mxu0 0.0
  %1613 = vmatpush.msra.mxu0 0.0
  %1614 = vmatpush.msra.mxu0 0.0
  %1615 = vmatpush.msra.mxu0 0.0
  %1616 = vmatpush.msra.mxu0 0.0
  %1617 = vmatpush.msra.mxu0 %v1600
  %1618 = vmatpush.msra.mxu0 %v1599
  %1619 = vmatpush.msra.mxu0 %v1598
  %1620 = vmatpush.msra.mxu0 %v1597
  %1621 = vmatpush.msra.mxu0 %v1596
  %1622 = vmatpush.msra.mxu0 %v1595
  %1623 = vmatpush.msra.mxu0 %v1594
  %1624 = vmatpush.msra.mxu0 %v1593
  %1625 = vmatmul.f32.gmra.mxu0 %v1607
  %v1626 = vpop.f32.mrf.mxu0
  %v1627 = vadd.f32 %v1603, %v1626
  %1628 = vdwg.mxu0
  %v1629 = vtanh.pop %v1627
  %1630 = vst [vmem:[%s8] sm:$0xff] %v1629
  // Predicated region
  $region34: #{gamma_linear_lstm_pallas.1} parent=0 // pred_check
    _
  $region35: #{gamma_linear_lstm_pallas.1} parent=0 // pred_check_branch
    %1632 = sbr.rel (0) target = $region37
  $region36: #{gamma_linear_lstm_pallas.1} parent=0 // pred_region
    _
  $region37: #{gamma_linear_lstm_pallas.1} parent=0 // pred_fallthru
    _
  // Predicated region
  $region38: #{gamma_linear_lstm_pallas.1} parent=0 // pred_check
    _
  $region39: #{gamma_linear_lstm_pallas.1} parent=0 // pred_check_branch
    %1634 = sbr.rel (0) target = $region41
  $region40: #{gamma_linear_lstm_pallas.1} parent=0 // pred_region
    _
  $region41: #{gamma_linear_lstm_pallas.1} parent=0 // pred_fallthru
    _

</llo_original>
